<compile_context>
chip_gen: v5e
topology: v5e:2x2
jax: 0.10.0
libtpu: 0.0.40
codegen_flags: <defaults>
</compile_context>

<pallas_src>
import functools
from types import SimpleNamespace

import numpy as np
import jax
import jax.numpy as jnp
from jax.experimental import pallas as pl
from jax.experimental.pallas import tpu as pltpu


# ----------------------------------------------------------------------------
# kl_annealing (numpy, glue — unchanged semantics from the PyTorch script)
# ----------------------------------------------------------------------------
class kl_annealing:
    def __init__(self, args, current_epoch=0):
        self.args = args
        self.current_epoch = current_epoch
        self.frange_cycle_linear(args.num_epoch, 0, 1,
                                 args.kl_anneal_cycle, args.kl_anneal_ratio)

    def update(self):
        self.current_epoch += 1

    def get_beta(self):
        return float(self.beta_array[self.current_epoch])

    def frange_cycle_linear(self, n_iter, start=0.0, stop=1.0, n_cycle=1, ratio=1):
        self.beta_array = np.ones(n_iter)
        if self.args.kl_anneal_type in ('Cyclical', 'Monotonic'):
            period = n_iter // n_cycle
            step = (stop - start) / ((period - 1) * ratio)
            for c in range(n_cycle):
                for i in range(period):
                    beta = i * step if i * step < stop else stop
                    self.beta_array[i + c * period] = beta


# ----------------------------------------------------------------------------
# Fused Pallas kernel: encoder x3 -> gaussian predictor -> decoder fusion ->
# generator -> per-tile loss partials.  One grid step = one (batch, hw-tile).
# ----------------------------------------------------------------------------
def _fused_vae_kernel(
    # data (per-tile blocks, channels-first, lane dim = tile_hw)
    x_t_ref, x_prev_ref, lbl_ref, eps_ref,
    # weights (full arrays, resident in VMEM across the whole grid)
    enc_w_ref, enc_b_ref, lab_w_ref, lab_b_ref,
    mu_wf_ref, mu_wl_ref, mu_b_ref,
    lv_wf_ref, lv_wl_ref, lv_b_ref,
    df_wf_ref, df_wl_ref, df_wz_ref, df_b_ref,
    gen_w_ref, gen_b_ref,
    # outputs
    gen_ref, mu_ref, logvar_ref, mse_part_ref, kld_part_ref,
):
    f32 = jnp.float32
    cdt = enc_w_ref.dtype  # compute (matmul-input) dtype, e.g. bf16

    x_t = x_t_ref[...]        # (3, T)
    x_prev = x_prev_ref[...]  # (3, T)
    lbl = lbl_ref[...]        # (3, T)

    # --- frame / label transformations (shared encoder weights, MXU, f32 acc) ---
    enc_w = enc_w_ref[...]
    enc_b = enc_b_ref[...]                                     # f32 (F, 1)
    f_t = jnp.maximum(jnp.dot(enc_w, x_t, preferred_element_type=f32) + enc_b, 0.0)
    f_prev = jnp.maximum(jnp.dot(enc_w, x_prev, preferred_element_type=f32) + enc_b, 0.0)
    l_feat = jnp.maximum(
        jnp.dot(lab_w_ref[...], lbl, preferred_element_type=f32) + lab_b_ref[...], 0.0)

    f_t_c = f_t.astype(cdt)
    f_prev_c = f_prev.astype(cdt)
    l_c = l_feat.astype(cdt)

    # --- Gaussian_Predictor: split weights -> no concat, no lane slicing ---
    mu = (jnp.dot(mu_wf_ref[...], f_t_c, preferred_element_type=f32)
          + jnp.dot(mu_wl_ref[...], l_c, preferred_element_type=f32)
          + mu_b_ref[...])
    logvar = (jnp.dot(lv_wf_ref[...], f_t_c, preferred_element_type=f32)
              + jnp.dot(lv_wl_ref[...], l_c, preferred_element_type=f32)
              + lv_b_ref[...])
    # reparameterization, f32 elementwise (EUP exp)
    z = mu + jnp.exp(0.5 * logvar) * eps_ref[...].astype(f32)

    # --- Decoder_Fusion(prev_feat, label_feat, z): split weights, no concat ---
    dec = (jnp.dot(df_wf_ref[...], f_prev_c, preferred_element_type=f32)
           + jnp.dot(df_wl_ref[...], l_c, preferred_element_type=f32)
           + jnp.dot(df_wz_ref[...], z.astype(cdt), preferred_element_type=f32)
           + df_b_ref[...])
    dec = jnp.maximum(dec, 0.0)

    # --- Generator -> RGB in [0, 1]; output block (3, T) is lane-dense ---
    pre = (jnp.dot(gen_w_ref[...], dec.astype(cdt), preferred_element_type=f32)
           + gen_b_ref[...])
    gen = 1.0 / (1.0 + jnp.exp(-pre))                          # sigmoid (EUP exp+recip)

    gen_ref[...] = gen
    mu_ref[...] = mu
    logvar_ref[...] = logvar

    # --- per-tile loss partials (reduced in the wrapper -> grid stays parallel) ---
    diff = x_t.astype(f32) - gen
    mse_sum = jnp.sum(diff * diff)                                        # sum sq. err
    kld_sum = -0.5 * jnp.sum(1.0 + logvar - mu * mu - jnp.exp(logvar))    # KL numerator
    mse_part_ref[...] = jnp.reshape(mse_sum, (1, 1))
    kld_part_ref[...] = jnp.reshape(kld_sum, (1, 1))


def _pick_tile_hw(hw):
    for t in (4096, 2048, 1024, 512, 256, 128):
        if hw % t == 0:
            return t
    return hw  # small frames: one full-extent block (still legal)


def vae_forward_step(params, img_prev, img_t, label_t, eps, beta, batch_size,
                     tile_hw=None, compute_dtype=jnp.bfloat16):
    """One VAE timestep (training_one_step body for one frame), fully fused.

    Inputs are NCHW images; they are only reshaped (free) to (B, 3, H*W) —
    no NCHW->NHWC transpose.  Set compute_dtype=jnp.float32 for bit-exact f32
    semantics (bf16 only changes the HBM representation of inputs/weights;
    accumulation and all elementwise/loss math is f32 either way).
    """
    B, C, H, W = img_t.shape
    assert C == 3
    HW = H * W
    N = eps.shape[1]
    if tile_hw is None:
        tile_hw = _pick_tile_hw(HW)
    assert HW % tile_hw == 0
    num_tiles = HW // tile_hw
    cdt = compute_dtype

    # channels-first flattened activations; reshape is layout-free on NCHW.
    x_t = img_t.reshape(B, 3, HW).astype(cdt)
    x_prev = img_prev.reshape(B, 3, HW).astype(cdt)
    lbl = label_t.reshape(B, 3, HW).astype(cdt)
    eps_c = eps.astype(cdt)

    wc = lambda name: params[name].astype(cdt)
    weight_ops = (
        wc("enc_w"), params["enc_b"], wc("lab_w"), params["lab_b"],
        wc("mu_wf"), wc("mu_wl"), params["mu_b"],
        wc("lv_wf"), wc("lv_wl"), params["lv_b"],
        wc("df_wf"), wc("df_wl"), wc("df_wz"), params["df_b"],
        wc("gen_w"), params["gen_b"],
    )

    def data_spec(c):
        return pl.BlockSpec((None, c, tile_hw), lambda b, i: (b, 0, i))

    def const_spec(a):  # whole (tiny) weight resident in VMEM; never re-fetched
        return pl.BlockSpec(a.shape, lambda b, i: (0, 0))

    scalar_out_spec = pl.BlockSpec((None, None, 1, 1), lambda b, i: (b, i, 0, 0))

    gen_flat, mu, logvar, mse_part, kld_part = pl.pallas_call(
        _fused_vae_kernel,
        grid=(B, num_tiles),
        in_specs=[data_spec(3), data_spec(3), data_spec(3), data_spec(N)]
                 + [const_spec(a) for a in weight_ops],
        out_specs=(
            pl.BlockSpec((None, 3, tile_hw), lambda b, i: (b, 0, i)),   # gen image
            pl.BlockSpec((None, N, tile_hw), lambda b, i: (b, 0, i)),   # mu
            pl.BlockSpec((None, N, tile_hw), lambda b, i: (b, 0, i)),   # logvar
            scalar_out_spec,                                            # mse partials
            scalar_out_spec,                                            # kld partials
        ),
        out_shape=(
            jax.ShapeDtypeStruct((B, 3, HW), jnp.float32),
            jax.ShapeDtypeStruct((B, N, HW), jnp.float32),
            jax.ShapeDtypeStruct((B, N, HW), jnp.float32),
            jax.ShapeDtypeStruct((B, num_tiles, 1, 1), jnp.float32),
            jax.ShapeDtypeStruct((B, num_tiles, 1, 1), jnp.float32),
        ),
        compiler_params=pltpu.CompilerParams(
            dimension_semantics=("parallel", "parallel")),
    )(x_t, x_prev, lbl, eps_c, *weight_ops)

    # tiny final reductions in XLA (few hundred scalars at most)
    mse = jnp.sum(mse_part) / float(B * 3 * HW)     # nn.MSELoss mean over all elements
    kld_sum = jnp.sum(kld_part)
    kl_loss = kld_sum / batch_size                  # kl_criterion(mu, logvar, B)
    loss = mse + beta * kl_loss

    gen_img = gen_flat.reshape(B, 3, H, W)          # free reshape back to NCHW
    return gen_img, mu, logvar, mse, kl_loss, loss


# ----------------------------------------------------------------------------
# Pure-JAX reference (same math / same bf16 boundary) for correctness checking
# ----------------------------------------------------------------------------
def vae_forward_step_ref(params, img_prev, img_t, label_t, eps, beta, batch_size,
                         compute_dtype=jnp.bfloat16):
    f32 = jnp.float32
    cdt = compute_dtype
    B, C, H, W = img_t.shape
    HW = H * W
    x_t = img_t.reshape(B, 3, HW).astype(cdt)
    x_prev = img_prev.reshape(B, 3, HW).astype(cdt)
    lbl = label_t.reshape(B, 3, HW).astype(cdt)
    eps_c = eps.astype(cdt)

    def mm(w, x):
        return jnp.einsum("of,bft->bot", w.astype(cdt), x,
                          preferred_element_type=f32)

    f_t = jnp.maximum(mm(params["enc_w"], x_t) + params["enc_b"], 0.0)
    f_prev = jnp.maximum(mm(params["enc_w"], x_prev) + params["enc_b"], 0.0)
    l_feat = jnp.maximum(mm(params["lab_w"], lbl) + params["lab_b"], 0.0)
    f_t_c, f_prev_c, l_c = f_t.astype(cdt), f_prev.astype(cdt), l_feat.astype(cdt)

    mu = mm(params["mu_wf"], f_t_c) + mm(params["mu_wl"], l_c) + params["mu_b"]
    logvar = mm(params["lv_wf"], f_t_c) + mm(params["lv_wl"], l_c) + params["lv_b"]
    z = mu + jnp.exp(0.5 * logvar) * eps_c.astype(f32)

    dec = (mm(params["df_wf"], f_prev_c) + mm(params["df_wl"], l_c)
           + mm(params["df_wz"], z.astype(cdt)) + params["df_b"])
    dec = jnp.maximum(dec, 0.0)

    pre = mm(params["gen_w"], dec.astype(cdt)) + params["gen_b"]
    gen = 1.0 / (1.0 + jnp.exp(-pre))

    diff = x_t.astype(f32) - gen
    mse = jnp.mean(diff * diff)
    kl_loss = -0.5 * jnp.sum(1.0 + logvar - mu * mu - jnp.exp(logvar)) / batch_size
    loss = mse + beta * kl_loss
    return gen.reshape(B, 3, H, W), mu, logvar, mse, kl_loss, loss


# ----------------------------------------------------------------------------
# Parameters (deterministic, synthetic 1x1-conv stand-ins for modules/)
# ----------------------------------------------------------------------------
def init_params(key, F_dim, L_dim, N_dim, D_out_dim):
    ks = jax.random.split(key, 16)

    def w(k, shape, fan_in):
        s = 1.0 / np.sqrt(fan_in)
        return jax.random.uniform(k, shape, jnp.float32, -s, s)

    p = {}
    # RGB_Encoder(3, F) / Label_Encoder(3, L)  (channels-first weights: (Cout, Cin))
    p["enc_w"] = w(ks[0], (F_dim, 3), 3);  p["enc_b"] = w(ks[1], (F_dim, 1), 3)
    p["lab_w"] = w(ks[2], (L_dim, 3), 3);  p["lab_b"] = w(ks[3], (L_dim, 1), 3)
    # Gaussian_Predictor(F+L, N): split into [mu | logvar] x [frame | label] parts
    fin = F_dim + L_dim
    p["mu_wf"] = w(ks[4], (N_dim, F_dim), fin); p["mu_wl"] = w(ks[5], (N_dim, L_dim), fin)
    p["mu_b"] = w(ks[6], (N_dim, 1), fin)
    p["lv_wf"] = w(ks[7], (N_dim, F_dim), fin); p["lv_wl"] = w(ks[8], (N_dim, L_dim), fin)
    p["lv_b"] = w(ks[9], (N_dim, 1), fin)
    # Decoder_Fusion(F+L+N, D): split into frame / label / z parts
    fin2 = F_dim + L_dim + N_dim
    p["df_wf"] = w(ks[10], (D_out_dim, F_dim), fin2)
    p["df_wl"] = w(ks[11], (D_out_dim, L_dim), fin2)
    p["df_wz"] = w(ks[12], (D_out_dim, N_dim), fin2)
    p["df_b"] = w(ks[13], (D_out_dim, 1), fin2)
    # Generator(D, 3)
    p["gen_w"] = w(ks[14], (3, D_out_dim), D_out_dim)
    p["gen_b"] = w(ks[15], (3, 1), D_out_dim)
    return p


# TODO(synk): optimizer (Adam), LR scheduler, teacher-forcing schedule,
# dataloaders, GIF/PSNR plotting and the multi-frame training loop are
# host-side training machinery with no Pallas equivalent and are omitted.


if __name__ == "__main__":
    args = SimpleNamespace(
        F_dim=16, L_dim=16, N_dim=16, D_out_dim=32,
        num_epoch=4, kl_anneal_cycle=2, kl_anneal_ratio=1.0,
        kl_anneal_type='Full',  # beta = 1.0
    )
    annealer = kl_annealing(args, current_epoch=0)
    beta = annealer.get_beta()

    B, C, H, W = 2, 3, 16, 16
    key = jax.random.PRNGKey(0)
    k_prev, k_t, k_lbl, k_eps, k_par = jax.random.split(key, 5)

    img_prev = jax.random.uniform(k_prev, (B, C, H, W), jnp.float32)     # frame i-1
    img_t = jax.random.uniform(k_t, (B, C, H, W), jnp.float32)           # frame i
    label_t = jax.random.uniform(k_lbl, (B, C, H, W), jnp.float32)       # pose label i
    eps = jax.random.normal(k_eps, (B, args.N_dim, H * W), jnp.float32)  # reparam noise

    params = init_params(k_par, args.F_dim, args.L_dim, args.N_dim, args.D_out_dim)

    # tile_hw=128 so the demo exercises a multi-tile (batch x hw) grid;
    # at real frame sizes use 1024-4096 (auto-picked when tile_hw=None).
    fwd = jax.jit(functools.partial(vae_forward_step, beta=beta,
                                    batch_size=float(B), tile_hw=128))
    out = fwd(params, img_prev, img_t, label_t, eps)
    gen_img, mu, logvar, mse, kl_loss, loss = jax.block_until_ready(out)

    # in-script correctness check against a pure-JAX reference (same bf16 math)
    ref = vae_forward_step_ref(params, img_prev, img_t, label_t, eps,
                               beta=beta, batch_size=float(B))
    gen_r, mu_r, logvar_r, mse_r, kl_r, loss_r = jax.block_until_ready(ref)

    assert gen_img.shape == (B, 3, H, W)
    assert mu.shape == (B, args.N_dim, H * W)
    assert logvar.shape == (B, args.N_dim, H * W)
    np.testing.assert_allclose(np.asarray(gen_img), np.asarray(gen_r), rtol=3e-2, atol=3e-2)
    np.testing.assert_allclose(np.asarray(mu), np.asarray(mu_r), rtol=3e-2, atol=3e-2)
    np.testing.assert_allclose(np.asarray(logvar), np.asarray(logvar_r), rtol=3e-2, atol=3e-2)
    np.testing.assert_allclose(float(mse), float(mse_r), rtol=3e-2, atol=3e-2)
    np.testing.assert_allclose(float(kl_loss), float(kl_r), rtol=3e-2, atol=3e-2)
    np.testing.assert_allclose(float(loss), float(loss_r), rtol=3e-2, atol=3e-2)
    assert bool(jnp.isfinite(loss))
    print("KERNEL_OK")
</pallas_src>

<mosaic_0001>
module attributes {stable_mosaic.version = 11 : i64} {
  func.func @_fused_vae_kernel(%arg0: i32, %arg1: i32, %arg2: memref<1x3x128xbf16, #tpu.memory_space<vmem>>, %arg3: memref<1x3x128xbf16, #tpu.memory_space<vmem>>, %arg4: memref<1x3x128xbf16, #tpu.memory_space<vmem>>, %arg5: memref<1x16x128xbf16, #tpu.memory_space<vmem>>, %arg6: memref<16x3xbf16, #tpu.memory_space<vmem>>, %arg7: memref<16x1xf32, #tpu.memory_space<vmem>>, %arg8: memref<16x3xbf16, #tpu.memory_space<vmem>>, %arg9: memref<16x1xf32, #tpu.memory_space<vmem>>, %arg10: memref<16x16xbf16, #tpu.memory_space<vmem>>, %arg11: memref<16x16xbf16, #tpu.memory_space<vmem>>, %arg12: memref<16x1xf32, #tpu.memory_space<vmem>>, %arg13: memref<16x16xbf16, #tpu.memory_space<vmem>>, %arg14: memref<16x16xbf16, #tpu.memory_space<vmem>>, %arg15: memref<16x1xf32, #tpu.memory_space<vmem>>, %arg16: memref<32x16xbf16, #tpu.memory_space<vmem>>, %arg17: memref<32x16xbf16, #tpu.memory_space<vmem>>, %arg18: memref<32x16xbf16, #tpu.memory_space<vmem>>, %arg19: memref<32x1xf32, #tpu.memory_space<vmem>>, %arg20: memref<3x32xbf16, #tpu.memory_space<vmem>>, %arg21: memref<3x1xf32, #tpu.memory_space<vmem>>, %arg22: memref<1x3x128xf32, #tpu.memory_space<vmem>>, %arg23: memref<1x16x128xf32, #tpu.memory_space<vmem>>, %arg24: memref<1x16x128xf32, #tpu.memory_space<vmem>>, %arg25: memref<1x1x1x1xf32, #tpu.memory_space<vmem>>, %arg26: memref<1x1x1x1xf32, #tpu.memory_space<vmem>>) attributes {dimension_semantics = [#tpu.dimension_semantics<parallel>, #tpu.dimension_semantics<parallel>], iteration_bounds = array<i64: 2, 2>, scalar_prefetch = 0 : i64, scratch_operands = 0 : i64, tpu.core_type = #tpu.core_type<tc>, window_params = [{transform_indices = @transform_0, window_bounds = array<i64: 1, 3, 128>}, {transform_indices = @transform_1, window_bounds = array<i64: 1, 3, 128>}, {transform_indices = @transform_2, window_bounds = array<i64: 1, 3, 128>}, {transform_indices = @transform_3, window_bounds = array<i64: 1, 16, 128>}, {pipeline_mode = #tpu.pipeline_mode<synchronous>, transform_indices = @transform_4, window_bounds = array<i64: 16, 3>}, {pipeline_mode = #tpu.pipeline_mode<synchronous>, transform_indices = @transform_5, window_bounds = array<i64: 16, 1>}, {pipeline_mode = #tpu.pipeline_mode<synchronous>, transform_indices = @transform_6, window_bounds = array<i64: 16, 3>}, {pipeline_mode = #tpu.pipeline_mode<synchronous>, transform_indices = @transform_7, window_bounds = array<i64: 16, 1>}, {pipeline_mode = #tpu.pipeline_mode<synchronous>, transform_indices = @transform_8, window_bounds = array<i64: 16, 16>}, {pipeline_mode = #tpu.pipeline_mode<synchronous>, transform_indices = @transform_9, window_bounds = array<i64: 16, 16>}, {pipeline_mode = #tpu.pipeline_mode<synchronous>, transform_indices = @transform_10, window_bounds = array<i64: 16, 1>}, {pipeline_mode = #tpu.pipeline_mode<synchronous>, transform_indices = @transform_11, window_bounds = array<i64: 16, 16>}, {pipeline_mode = #tpu.pipeline_mode<synchronous>, transform_indices = @transform_12, window_bounds = array<i64: 16, 16>}, {pipeline_mode = #tpu.pipeline_mode<synchronous>, transform_indices = @transform_13, window_bounds = array<i64: 16, 1>}, {pipeline_mode = #tpu.pipeline_mode<synchronous>, transform_indices = @transform_14, window_bounds = array<i64: 32, 16>}, {pipeline_mode = #tpu.pipeline_mode<synchronous>, transform_indices = @transform_15, window_bounds = array<i64: 32, 16>}, {pipeline_mode = #tpu.pipeline_mode<synchronous>, transform_indices = @transform_16, window_bounds = array<i64: 32, 16>}, {pipeline_mode = #tpu.pipeline_mode<synchronous>, transform_indices = @transform_17, window_bounds = array<i64: 32, 1>}, {pipeline_mode = #tpu.pipeline_mode<synchronous>, transform_indices = @transform_18, window_bounds = array<i64: 3, 32>}, {pipeline_mode = #tpu.pipeline_mode<synchronous>, transform_indices = @transform_19, window_bounds = array<i64: 3, 1>}, {transform_indices = @transform_20, window_bounds = array<i64: 1, 3, 128>}, {transform_indices = @transform_21, window_bounds = array<i64: 1, 16, 128>}, {transform_indices = @transform_22, window_bounds = array<i64: 1, 16, 128>}, {transform_indices = @transform_23, window_bounds = array<i64: 1, 1, 1, 1>}, {transform_indices = @transform_24, window_bounds = array<i64: 1, 1, 1, 1>}]} {
    %c0 = arith.constant 0 : index
    %c0_0 = arith.constant 0 : index
    %c0_1 = arith.constant 0 : index
    %0 = vector.load %arg2[%c0, %c0_0, %c0_1] : memref<1x3x128xbf16, #tpu.memory_space<vmem>>, vector<1x3x128xbf16>
    %1 = vector.shape_cast %0 : vector<1x3x128xbf16> to vector<3x128xbf16>
    %c0_2 = arith.constant 0 : index
    %c0_3 = arith.constant 0 : index
    %c0_4 = arith.constant 0 : index
    %2 = vector.load %arg3[%c0_2, %c0_3, %c0_4] : memref<1x3x128xbf16, #tpu.memory_space<vmem>>, vector<1x3x128xbf16>
    %3 = vector.shape_cast %2 : vector<1x3x128xbf16> to vector<3x128xbf16>
    %c0_5 = arith.constant 0 : index
    %c0_6 = arith.constant 0 : index
    %c0_7 = arith.constant 0 : index
    %4 = vector.load %arg4[%c0_5, %c0_6, %c0_7] : memref<1x3x128xbf16, #tpu.memory_space<vmem>>, vector<1x3x128xbf16>
    %5 = vector.shape_cast %4 : vector<1x3x128xbf16> to vector<3x128xbf16>
    %c0_8 = arith.constant 0 : index
    %c0_9 = arith.constant 0 : index
    %6 = vector.load %arg6[%c0_8, %c0_9] : memref<16x3xbf16, #tpu.memory_space<vmem>>, vector<16x3xbf16>
    %c0_10 = arith.constant 0 : index
    %c0_11 = arith.constant 0 : index
    %7 = vector.load %arg7[%c0_10, %c0_11] : memref<16x1xf32, #tpu.memory_space<vmem>>, vector<16x1xf32>
    %cst = arith.constant dense<0.000000e+00> : vector<16x128xf32>
    %8 = tpu.matmul %6, %1, %cst {dimension_numbers = #tpu.dot_dimension_numbers<[1], [0], [0], [1], [0, 0, 1, 1], [], []>} : vector<16x3xbf16>, vector<3x128xbf16>, vector<16x128xf32> -> vector<16x128xf32>
    %9 = vector.broadcast %7 : vector<16x1xf32> to vector<16x128xf32>
    %10 = arith.addf %8, %9 : vector<16x128xf32>
    %cst_12 = arith.constant 0.000000e+00 : f32
    %11 = vector.broadcast %cst_12 : f32 to vector<16x128xf32>
    %12 = arith.maximumf %10, %11 : vector<16x128xf32>
    %cst_13 = arith.constant dense<0.000000e+00> : vector<16x128xf32>
    %13 = tpu.matmul %6, %3, %cst_13 {dimension_numbers = #tpu.dot_dimension_numbers<[1], [0], [0], [1], [0, 0, 1, 1], [], []>} : vector<16x3xbf16>, vector<3x128xbf16>, vector<16x128xf32> -> vector<16x128xf32>
    %14 = vector.broadcast %7 : vector<16x1xf32> to vector<16x128xf32>
    %15 = arith.addf %13, %14 : vector<16x128xf32>
    %cst_14 = arith.constant 0.000000e+00 : f32
    %16 = vector.broadcast %cst_14 : f32 to vector<16x128xf32>
    %17 = arith.maximumf %15, %16 : vector<16x128xf32>
    %c0_15 = arith.constant 0 : index
    %c0_16 = arith.constant 0 : index
    %18 = vector.load %arg8[%c0_15, %c0_16] : memref<16x3xbf16, #tpu.memory_space<vmem>>, vector<16x3xbf16>
    %cst_17 = arith.constant dense<0.000000e+00> : vector<16x128xf32>
    %19 = tpu.matmul %18, %5, %cst_17 {dimension_numbers = #tpu.dot_dimension_numbers<[1], [0], [0], [1], [0, 0, 1, 1], [], []>} : vector<16x3xbf16>, vector<3x128xbf16>, vector<16x128xf32> -> vector<16x128xf32>
    %c0_18 = arith.constant 0 : index
    %c0_19 = arith.constant 0 : index
    %20 = vector.load %arg9[%c0_18, %c0_19] : memref<16x1xf32, #tpu.memory_space<vmem>>, vector<16x1xf32>
    %21 = vector.broadcast %20 : vector<16x1xf32> to vector<16x128xf32>
    %22 = arith.addf %19, %21 : vector<16x128xf32>
    %cst_20 = arith.constant 0.000000e+00 : f32
    %23 = vector.broadcast %cst_20 : f32 to vector<16x128xf32>
    %24 = arith.maximumf %22, %23 : vector<16x128xf32>
    %25 = arith.truncf %12 : vector<16x128xf32> to vector<16x128xbf16>
    %26 = arith.truncf %17 : vector<16x128xf32> to vector<16x128xbf16>
    %27 = arith.truncf %24 : vector<16x128xf32> to vector<16x128xbf16>
    %c0_21 = arith.constant 0 : index
    %c0_22 = arith.constant 0 : index
    %28 = vector.load %arg10[%c0_21, %c0_22] : memref<16x16xbf16, #tpu.memory_space<vmem>>, vector<16x16xbf16>
    %cst_23 = arith.constant dense<0.000000e+00> : vector<16x128xf32>
    %29 = tpu.matmul %28, %25, %cst_23 {dimension_numbers = #tpu.dot_dimension_numbers<[1], [0], [0], [1], [0, 0, 1, 1], [], []>} : vector<16x16xbf16>, vector<16x128xbf16>, vector<16x128xf32> -> vector<16x128xf32>
    %c0_24 = arith.constant 0 : index
    %c0_25 = arith.constant 0 : index
    %30 = vector.load %arg11[%c0_24, %c0_25] : memref<16x16xbf16, #tpu.memory_space<vmem>>, vector<16x16xbf16>
    %cst_26 = arith.constant dense<0.000000e+00> : vector<16x128xf32>
    %31 = tpu.matmul %30, %27, %cst_26 {dimension_numbers = #tpu.dot_dimension_numbers<[1], [0], [0], [1], [0, 0, 1, 1], [], []>} : vector<16x16xbf16>, vector<16x128xbf16>, vector<16x128xf32> -> vector<16x128xf32>
    %32 = arith.addf %29, %31 : vector<16x128xf32>
    %c0_27 = arith.constant 0 : index
    %c0_28 = arith.constant 0 : index
    %33 = vector.load %arg12[%c0_27, %c0_28] : memref<16x1xf32, #tpu.memory_space<vmem>>, vector<16x1xf32>
    %34 = vector.broadcast %33 : vector<16x1xf32> to vector<16x128xf32>
    %35 = arith.addf %32, %34 : vector<16x128xf32>
    %c0_29 = arith.constant 0 : index
    %c0_30 = arith.constant 0 : index
    %36 = vector.load %arg13[%c0_29, %c0_30] : memref<16x16xbf16, #tpu.memory_space<vmem>>, vector<16x16xbf16>
    %cst_31 = arith.constant dense<0.000000e+00> : vector<16x128xf32>
    %37 = tpu.matmul %36, %25, %cst_31 {dimension_numbers = #tpu.dot_dimension_numbers<[1], [0], [0], [1], [0, 0, 1, 1], [], []>} : vector<16x16xbf16>, vector<16x128xbf16>, vector<16x128xf32> -> vector<16x128xf32>
    %c0_32 = arith.constant 0 : index
    %c0_33 = arith.constant 0 : index
    %38 = vector.load %arg14[%c0_32, %c0_33] : memref<16x16xbf16, #tpu.memory_space<vmem>>, vector<16x16xbf16>
    %cst_34 = arith.constant dense<0.000000e+00> : vector<16x128xf32>
    %39 = tpu.matmul %38, %27, %cst_34 {dimension_numbers = #tpu.dot_dimension_numbers<[1], [0], [0], [1], [0, 0, 1, 1], [], []>} : vector<16x16xbf16>, vector<16x128xbf16>, vector<16x128xf32> -> vector<16x128xf32>
    %40 = arith.addf %37, %39 : vector<16x128xf32>
    %c0_35 = arith.constant 0 : index
    %c0_36 = arith.constant 0 : index
    %41 = vector.load %arg15[%c0_35, %c0_36] : memref<16x1xf32, #tpu.memory_space<vmem>>, vector<16x1xf32>
    %42 = vector.broadcast %41 : vector<16x1xf32> to vector<16x128xf32>
    %43 = arith.addf %40, %42 : vector<16x128xf32>
    %cst_37 = arith.constant 5.000000e-01 : f32
    %44 = vector.broadcast %cst_37 : f32 to vector<16x128xf32>
    %45 = arith.mulf %44, %43 : vector<16x128xf32>
    %46 = math.exp %45 : vector<16x128xf32>
    %c0_38 = arith.constant 0 : index
    %c0_39 = arith.constant 0 : index
    %c0_40 = arith.constant 0 : index
    %47 = vector.load %arg5[%c0_38, %c0_39, %c0_40] : memref<1x16x128xbf16, #tpu.memory_space<vmem>>, vector<1x16x128xbf16>
    %48 = vector.shape_cast %47 : vector<1x16x128xbf16> to vector<16x128xbf16>
    %49 = arith.extf %48 : vector<16x128xbf16> to vector<16x128xf32>
    %50 = arith.mulf %46, %49 : vector<16x128xf32>
    %51 = arith.addf %35, %50 : vector<16x128xf32>
    %c0_41 = arith.constant 0 : index
    %c0_42 = arith.constant 0 : index
    %52 = vector.load %arg16[%c0_41, %c0_42] : memref<32x16xbf16, #tpu.memory_space<vmem>>, vector<32x16xbf16>
    %cst_43 = arith.constant dense<0.000000e+00> : vector<32x128xf32>
    %53 = tpu.matmul %52, %26, %cst_43 {dimension_numbers = #tpu.dot_dimension_numbers<[1], [0], [0], [1], [0, 0, 1, 1], [], []>} : vector<32x16xbf16>, vector<16x128xbf16>, vector<32x128xf32> -> vector<32x128xf32>
    %c0_44 = arith.constant 0 : index
    %c0_45 = arith.constant 0 : index
    %54 = vector.load %arg17[%c0_44, %c0_45] : memref<32x16xbf16, #tpu.memory_space<vmem>>, vector<32x16xbf16>
    %cst_46 = arith.constant dense<0.000000e+00> : vector<32x128xf32>
    %55 = tpu.matmul %54, %27, %cst_46 {dimension_numbers = #tpu.dot_dimension_numbers<[1], [0], [0], [1], [0, 0, 1, 1], [], []>} : vector<32x16xbf16>, vector<16x128xbf16>, vector<32x128xf32> -> vector<32x128xf32>
    %56 = arith.addf %53, %55 : vector<32x128xf32>
    %c0_47 = arith.constant 0 : index
    %c0_48 = arith.constant 0 : index
    %57 = vector.load %arg18[%c0_47, %c0_48] : memref<32x16xbf16, #tpu.memory_space<vmem>>, vector<32x16xbf16>
    %58 = arith.truncf %51 : vector<16x128xf32> to vector<16x128xbf16>
    %cst_49 = arith.constant dense<0.000000e+00> : vector<32x128xf32>
    %59 = tpu.matmul %57, %58, %cst_49 {dimension_numbers = #tpu.dot_dimension_numbers<[1], [0], [0], [1], [0, 0, 1, 1], [], []>} : vector<32x16xbf16>, vector<16x128xbf16>, vector<32x128xf32> -> vector<32x128xf32>
    %60 = arith.addf %56, %59 : vector<32x128xf32>
    %c0_50 = arith.constant 0 : index
    %c0_51 = arith.constant 0 : index
    %61 = vector.load %arg19[%c0_50, %c0_51] : memref<32x1xf32, #tpu.memory_space<vmem>>, vector<32x1xf32>
    %62 = vector.broadcast %61 : vector<32x1xf32> to vector<32x128xf32>
    %63 = arith.addf %60, %62 : vector<32x128xf32>
    %cst_52 = arith.constant 0.000000e+00 : f32
    %64 = vector.broadcast %cst_52 : f32 to vector<32x128xf32>
    %65 = arith.maximumf %63, %64 : vector<32x128xf32>
    %c0_53 = arith.constant 0 : index
    %c0_54 = arith.constant 0 : index
    %66 = vector.load %arg20[%c0_53, %c0_54] : memref<3x32xbf16, #tpu.memory_space<vmem>>, vector<3x32xbf16>
    %67 = arith.truncf %65 : vector<32x128xf32> to vector<32x128xbf16>
    %cst_55 = arith.constant dense<0.000000e+00> : vector<3x128xf32>
    %68 = tpu.matmul %66, %67, %cst_55 {dimension_numbers = #tpu.dot_dimension_numbers<[1], [0], [0], [1], [0, 0, 1, 1], [], []>} : vector<3x32xbf16>, vector<32x128xbf16>, vector<3x128xf32> -> vector<3x128xf32>
    %c0_56 = arith.constant 0 : index
    %c0_57 = arith.constant 0 : index
    %69 = vector.load %arg21[%c0_56, %c0_57] : memref<3x1xf32, #tpu.memory_space<vmem>>, vector<3x1xf32>
    %70 = vector.broadcast %69 : vector<3x1xf32> to vector<3x128xf32>
    %71 = arith.addf %68, %70 : vector<3x128xf32>
    %cst_58 = arith.constant 0.000000e+00 : f32
    %72 = vector.broadcast %cst_58 : f32 to vector<3x128xf32>
    %73 = arith.subf %72, %71 : vector<3x128xf32>
    %74 = math.exp %73 : vector<3x128xf32>
    %cst_59 = arith.constant 1.000000e+00 : f32
    %75 = vector.broadcast %cst_59 : f32 to vector<3x128xf32>
    %76 = arith.addf %75, %74 : vector<3x128xf32>
    %cst_60 = arith.constant 1.000000e+00 : f32
    %77 = vector.broadcast %cst_60 : f32 to vector<3x128xf32>
    %78 = arith.divf %77, %76 : vector<3x128xf32>
    %c0_61 = arith.constant 0 : index
    %c0_62 = arith.constant 0 : index
    %c0_63 = arith.constant 0 : index
    %79 = vector.load %arg22[%c0_61, %c0_62, %c0_63] : memref<1x3x128xf32, #tpu.memory_space<vmem>>, vector<1x3x128xf32>
    %80 = vector.shape_cast %79 : vector<1x3x128xf32> to vector<3x128xf32>
    %81 = vector.shape_cast %78 : vector<3x128xf32> to vector<1x3x128xf32>
    tpu.vector_store %arg22[%c0_61, %c0_62, %c0_63], %81 {strides = array<i32>} : memref<1x3x128xf32, #tpu.memory_space<vmem>>, vector<1x3x128xf32>,
    %c0_64 = arith.constant 0 : index
    %c0_65 = arith.constant 0 : index
    %c0_66 = arith.constant 0 : index
    %82 = vector.load %arg23[%c0_64, %c0_65, %c0_66] : memref<1x16x128xf32, #tpu.memory_space<vmem>>, vector<1x16x128xf32>
    %83 = vector.shape_cast %82 : vector<1x16x128xf32> to vector<16x128xf32>
    %84 = vector.shape_cast %35 : vector<16x128xf32> to vector<1x16x128xf32>
    tpu.vector_store %arg23[%c0_64, %c0_65, %c0_66], %84 {strides = array<i32>} : memref<1x16x128xf32, #tpu.memory_space<vmem>>, vector<1x16x128xf32>,
    %c0_67 = arith.constant 0 : index
    %c0_68 = arith.constant 0 : index
    %c0_69 = arith.constant 0 : index
    %85 = vector.load %arg24[%c0_67, %c0_68, %c0_69] : memref<1x16x128xf32, #tpu.memory_space<vmem>>, vector<1x16x128xf32>
    %86 = vector.shape_cast %85 : vector<1x16x128xf32> to vector<16x128xf32>
    %87 = vector.shape_cast %43 : vector<16x128xf32> to vector<1x16x128xf32>
    tpu.vector_store %arg24[%c0_67, %c0_68, %c0_69], %87 {strides = array<i32>} : memref<1x16x128xf32, #tpu.memory_space<vmem>>, vector<1x16x128xf32>,
    %88 = arith.extf %1 : vector<3x128xbf16> to vector<3x128xf32>
    %89 = arith.subf %88, %78 : vector<3x128xf32>
    %90 = arith.mulf %89, %89 : vector<3x128xf32>
    %91 = vector.shape_cast %90 : vector<3x128xf32> to vector<1x3x128xf32>
    %cst_70 = arith.constant dense<0.000000e+00> : vector<1xf32>
    %92 = vector.multi_reduction <add>, %91, %cst_70 [1, 2] : vector<1x3x128xf32> to vector<1xf32>
    %93 = vector.shape_cast %92 : vector<1xf32> to vector<1x1x1xf32>
    %94 = vector.extract %93[0, 0, 0] : f32 from vector<1x1x1xf32>
    %cst_71 = arith.constant 1.000000e+00 : f32
    %95 = vector.broadcast %cst_71 : f32 to vector<16x128xf32>
    %96 = arith.addf %95, %43 : vector<16x128xf32>
    %97 = arith.mulf %35, %35 : vector<16x128xf32>
    %98 = arith.subf %96, %97 : vector<16x128xf32>
    %99 = math.exp %43 : vector<16x128xf32>
    %100 = arith.subf %98, %99 : vector<16x128xf32>
    %101 = vector.shape_cast %100 : vector<16x128xf32> to vector<1x16x128xf32>
    %cst_72 = arith.constant dense<0.000000e+00> : vector<1xf32>
    %102 = vector.multi_reduction <add>, %101, %cst_72 [1, 2] : vector<1x16x128xf32> to vector<1xf32>
    %103 = vector.shape_cast %102 : vector<1xf32> to vector<1x1x1xf32>
    %104 = vector.extract %103[0, 0, 0] : f32 from vector<1x1x1xf32>
    %cst_73 = arith.constant -5.000000e-01 : f32
    %105 = arith.mulf %cst_73, %104 : f32
    %106 = vector.broadcast %94 : f32 to vector<1x1xf32>
    %c0_74 = arith.constant 0 : index
    %c0_75 = arith.constant 0 : index
    %c0_76 = arith.constant 0 : index
    %c0_77 = arith.constant 0 : index
    %107 = vector.load %arg25[%c0_74, %c0_75, %c0_76, %c0_77] : memref<1x1x1x1xf32, #tpu.memory_space<vmem>>, vector<1x1x1x1xf32>
    %108 = vector.shape_cast %107 : vector<1x1x1x1xf32> to vector<1x1xf32>
    %109 = vector.shape_cast %106 : vector<1x1xf32> to vector<1x1x1x1xf32>
    tpu.vector_store %arg25[%c0_74, %c0_75, %c0_76, %c0_77], %109 {strides = array<i32>} : memref<1x1x1x1xf32, #tpu.memory_space<vmem>>, vector<1x1x1x1xf32>,
    %110 = vector.broadcast %105 : f32 to vector<1x1xf32>
    %c0_78 = arith.constant 0 : index
    %c0_79 = arith.constant 0 : index
    %c0_80 = arith.constant 0 : index
    %c0_81 = arith.constant 0 : index
    %111 = vector.load %arg26[%c0_78, %c0_79, %c0_80, %c0_81] : memref<1x1x1x1xf32, #tpu.memory_space<vmem>>, vector<1x1x1x1xf32>
    %112 = vector.shape_cast %111 : vector<1x1x1x1xf32> to vector<1x1xf32>
    %113 = vector.shape_cast %110 : vector<1x1xf32> to vector<1x1x1x1xf32>
    tpu.vector_store %arg26[%c0_78, %c0_79, %c0_80, %c0_81], %113 {strides = array<i32>} : memref<1x1x1x1xf32, #tpu.memory_space<vmem>>, vector<1x1x1x1xf32>,
    return
  }
  func.func @transform_0(%arg0: i32, %arg1: i32) -> (i32, i32, i32) {
    %c0_i32 = arith.constant 0 : i32
    %c0_i32_0 = arith.constant 0 : i32
    return %arg0, %c0_i32, %arg1 : i32, i32, i32
  }
  func.func @transform_1(%arg0: i32, %arg1: i32) -> (i32, i32, i32) {
    %c0_i32 = arith.constant 0 : i32
    %c0_i32_0 = arith.constant 0 : i32
    return %arg0, %c0_i32, %arg1 : i32, i32, i32
  }
  func.func @transform_2(%arg0: i32, %arg1: i32) -> (i32, i32, i32) {
    %c0_i32 = arith.constant 0 : i32
    %c0_i32_0 = arith.constant 0 : i32
    return %arg0, %c0_i32, %arg1 : i32, i32, i32
  }
  func.func @transform_3(%arg0: i32, %arg1: i32) -> (i32, i32, i32) {
    %c0_i32 = arith.constant 0 : i32
    %c0_i32_0 = arith.constant 0 : i32
    return %arg0, %c0_i32, %arg1 : i32, i32, i32
  }
  func.func @transform_4(%arg0: i32, %arg1: i32) -> (i32, i32) {
    %c0_i32 = arith.constant 0 : i32
    %c0_i32_0 = arith.constant 0 : i32
    %c0_i32_1 = arith.constant 0 : i32
    return %c0_i32, %c0_i32_0 : i32, i32
  }
  func.func @transform_5(%arg0: i32, %arg1: i32) -> (i32, i32) {
    %c0_i32 = arith.constant 0 : i32
    %c0_i32_0 = arith.constant 0 : i32
    %c0_i32_1 = arith.constant 0 : i32
    return %c0_i32, %c0_i32_0 : i32, i32
  }
  func.func @transform_6(%arg0: i32, %arg1: i32) -> (i32, i32) {
    %c0_i32 = arith.constant 0 : i32
    %c0_i32_0 = arith.constant 0 : i32
    %c0_i32_1 = arith.constant 0 : i32
    return %c0_i32, %c0_i32_0 : i32, i32
  }
  func.func @transform_7(%arg0: i32, %arg1: i32) -> (i32, i32) {
    %c0_i32 = arith.constant 0 : i32
    %c0_i32_0 = arith.constant 0 : i32
    %c0_i32_1 = arith.constant 0 : i32
    return %c0_i32, %c0_i32_0 : i32, i32
  }
  func.func @transform_8(%arg0: i32, %arg1: i32) -> (i32, i32) {
    %c0_i32 = arith.constant 0 : i32
    %c0_i32_0 = arith.constant 0 : i32
    %c0_i32_1 = arith.constant 0 : i32
    return %c0_i32, %c0_i32_0 : i32, i32
  }
  func.func @transform_9(%arg0: i32, %arg1: i32) -> (i32, i32) {
    %c0_i32 = arith.constant 0 : i32
    %c0_i32_0 = arith.constant 0 : i32
    %c0_i32_1 = arith.constant 0 : i32
    return %c0_i32, %c0_i32_0 : i32, i32
  }
  func.func @transform_10(%arg0: i32, %arg1: i32) -> (i32, i32) {
    %c0_i32 = arith.constant 0 : i32
    %c0_i32_0 = arith.constant 0 : i32
    %c0_i32_1 = arith.constant 0 : i32
    return %c0_i32, %c0_i32_0 : i32, i32
  }
  func.func @transform_11(%arg0: i32, %arg1: i32) -> (i32, i32) {
    %c0_i32 = arith.constant 0 : i32
    %c0_i32_0 = arith.constant 0 : i32
    %c0_i32_1 = arith.constant 0 : i32
    return %c0_i32, %c0_i32_0 : i32, i32
  }
  func.func @transform_12(%arg0: i32, %arg1: i32) -> (i32, i32) {
    %c0_i32 = arith.constant 0 : i32
    %c0_i32_0 = arith.constant 0 : i32
    %c0_i32_1 = arith.constant 0 : i32
    return %c0_i32, %c0_i32_0 : i32, i32
  }
  func.func @transform_13(%arg0: i32, %arg1: i32) -> (i32, i32) {
    %c0_i32 = arith.constant 0 : i32
    %c0_i32_0 = arith.constant 0 : i32
    %c0_i32_1 = arith.constant 0 : i32
    return %c0_i32, %c0_i32_0 : i32, i32
  }
  func.func @transform_14(%arg0: i32, %arg1: i32) -> (i32, i32) {
    %c0_i32 = arith.constant 0 : i32
    %c0_i32_0 = arith.constant 0 : i32
    %c0_i32_1 = arith.constant 0 : i32
    return %c0_i32, %c0_i32_0 : i32, i32
  }
  func.func @transform_15(%arg0: i32, %arg1: i32) -> (i32, i32) {
    %c0_i32 = arith.constant 0 : i32
    %c0_i32_0 = arith.constant 0 : i32
    %c0_i32_1 = arith.constant 0 : i32
    return %c0_i32, %c0_i32_0 : i32, i32
  }
  func.func @transform_16(%arg0: i32, %arg1: i32) -> (i32, i32) {
    %c0_i32 = arith.constant 0 : i32
    %c0_i32_0 = arith.constant 0 : i32
    %c0_i32_1 = arith.constant 0 : i32
    return %c0_i32, %c0_i32_0 : i32, i32
  }
  func.func @transform_17(%arg0: i32, %arg1: i32) -> (i32, i32) {
    %c0_i32 = arith.constant 0 : i32
    %c0_i32_0 = arith.constant 0 : i32
    %c0_i32_1 = arith.constant 0 : i32
    return %c0_i32, %c0_i32_0 : i32, i32
  }
  func.func @transform_18(%arg0: i32, %arg1: i32) -> (i32, i32) {
    %c0_i32 = arith.constant 0 : i32
    %c0_i32_0 = arith.constant 0 : i32
    %c0_i32_1 = arith.constant 0 : i32
    return %c0_i32, %c0_i32_0 : i32, i32
  }
  func.func @transform_19(%arg0: i32, %arg1: i32) -> (i32, i32) {
    %c0_i32 = arith.constant 0 : i32
    %c0_i32_0 = arith.constant 0 : i32
    %c0_i32_1 = arith.constant 0 : i32
    return %c0_i32, %c0_i32_0 : i32, i32
  }
  func.func @transform_20(%arg0: i32, %arg1: i32) -> (i32, i32, i32) {
    %c0_i32 = arith.constant 0 : i32
    %c0_i32_0 = arith.constant 0 : i32
    return %arg0, %c0_i32, %arg1 : i32, i32, i32
  }
  func.func @transform_21(%arg0: i32, %arg1: i32) -> (i32, i32, i32) {
    %c0_i32 = arith.constant 0 : i32
    %c0_i32_0 = arith.constant 0 : i32
    return %arg0, %c0_i32, %arg1 : i32, i32, i32
  }
  func.func @transform_22(%arg0: i32, %arg1: i32) -> (i32, i32, i32) {
    %c0_i32 = arith.constant 0 : i32
    %c0_i32_0 = arith.constant 0 : i32
    return %arg0, %c0_i32, %arg1 : i32, i32, i32
  }
  func.func @transform_23(%arg0: i32, %arg1: i32) -> (i32, i32, i32, i32) {
    %c0_i32 = arith.constant 0 : i32
    %c0_i32_0 = arith.constant 0 : i32
    %c0_i32_1 = arith.constant 0 : i32
    return %arg0, %arg1, %c0_i32, %c0_i32_0 : i32, i32, i32, i32
  }
  func.func @transform_24(%arg0: i32, %arg1: i32) -> (i32, i32, i32, i32) {
    %c0_i32 = arith.constant 0 : i32
    %c0_i32_0 = arith.constant 0 : i32
    %c0_i32_1 = arith.constant 0 : i32
    return %arg0, %arg1, %c0_i32, %c0_i32_0 : i32, i32, i32, i32
  }
}

</mosaic_0001>

<llo_original>
// kernel: vae_forward_step.1
$region0: #{vae_forward_step.1}
  #allocation0 [shape = 'u32[]', space=smem, size = 0x4, offset = 0x4, fixed_abs, tag = 'smem constant byte address 0x4 - core index']
  #allocation1 [shape = 'u32[72,128]{1,0:T(1,128)}', space=vmem, size = 0x9000, scoped, tag = 'internal scratch']
  %s0 = inlined_call_operand.vmem [shape: bf16[2,3,256], index: 0, kind: input, shape index: {}]
  %s1 = inlined_call_operand.vmem [shape: bf16[2,3,256], index: 1, kind: input, shape index: {}]
  %s2 = inlined_call_operand.vmem [shape: bf16[2,3,256], index: 2, kind: input, shape index: {}]
  %s3 = inlined_call_operand.vmem [shape: bf16[2,16,256], index: 3, kind: input, shape index: {}]
  %s4 = inlined_call_operand.vmem [shape: bf16[16,3], index: 4, kind: input, shape index: {}]
  %s5 = inlined_call_operand.vmem [shape: f32[16,1], index: 5, kind: input, shape index: {}]
  %s6 = inlined_call_operand.vmem [shape: bf16[16,3], index: 6, kind: input, shape index: {}]
  %s7 = inlined_call_operand.vmem [shape: f32[16,1], index: 7, kind: input, shape index: {}]
  %s8 = inlined_call_operand.vmem [shape: bf16[16,16], index: 8, kind: input, shape index: {}]
  %s9 = inlined_call_operand.vmem [shape: bf16[16,16], index: 9, kind: input, shape index: {}]
  %s10 = inlined_call_operand.vmem [shape: f32[16,1], index: 10, kind: input, shape index: {}]
  %s11 = inlined_call_operand.vmem [shape: bf16[16,16], index: 11, kind: input, shape index: {}]
  %s12 = inlined_call_operand.vmem [shape: bf16[16,16], index: 12, kind: input, shape index: {}]
  %s13 = inlined_call_operand.vmem [shape: f32[16,1], index: 13, kind: input, shape index: {}]
  %s14 = inlined_call_operand.vmem [shape: bf16[32,16], index: 14, kind: input, shape index: {}]
  %s15 = inlined_call_operand.vmem [shape: bf16[32,16], index: 15, kind: input, shape index: {}]
  %s16 = inlined_call_operand.vmem [shape: bf16[32,16], index: 16, kind: input, shape index: {}]
  %s17 = inlined_call_operand.vmem [shape: f32[32,1], index: 17, kind: input, shape index: {}]
  %s18 = inlined_call_operand.vmem [shape: bf16[3,32], index: 18, kind: input, shape index: {}]
  %s19 = inlined_call_operand.vmem [shape: f32[3,1], index: 19, kind: input, shape index: {}]
  %s20 = inlined_call_operand.vmem [shape: f32[2,3,256], index: 20, kind: output, shape index: {0}]
  %s21 = inlined_call_operand.hbm [shape: f32[2,16,256], index: 21, kind: output, shape index: {1}]
  %s22 = inlined_call_operand.hbm [shape: f32[2,16,256], index: 22, kind: output, shape index: {2}]
  %s23 = inlined_call_operand.vmem [shape: f32[2,2,1,1], index: 23, kind: output, shape index: {3}]
  %s24 = inlined_call_operand.vmem [shape: f32[2,2,1,1], index: 24, kind: output, shape index: {4}]
  %25 = xla_tuple %s20, %s21, %s22, %s23, %s24
  %s26 = sld [smem:[#allocation0]]
  $region186: #{vae_forward_step.1} parent=0
    _
  %s28 = ssub.s32 1, %s26
  %s29 = scalar_select 0, %s28, %s26
  $region1: #{vae_forward_step.1} parent=0
    #allocation2 [shape = 'u8[8192]{0}', space=vmem, size = 0x2000, scoped, tag = 'input window, operand 3']
    #allocation3 [shape = 'u8[16384]{0}', space=vmem, size = 0x4000, scoped, tag = 'output window, operand 1']
    #allocation4 [shape = 's32[2]{0}', space=sflag, size = 0x8, scoped, tag = 'scoped memory for vae_forward_step.1']
    #allocation5 [shape = 'u8[16384]{0}', space=vmem, size = 0x4000, scoped, tag = 'output window, operand 2']
    #allocation6 [shape = 's32[2]{0}', space=sflag, size = 0x8, scoped, tag = 'scoped memory for vae_forward_step.1']
    %30 = vsyncpa [#allocation4], 0
    %s31 = scalar_lea.sflag [#allocation4], 1
    %32 = vsyncpa %s31, 0
    %33 = vsyncpa [#allocation6], 0
    %s34 = scalar_lea.sflag [#allocation6], 1
    %35 = vsyncpa %s34, 0
    loop: start=0, step=1, limit=6
    $region2: #{vae_forward_step.1} parent=1 // loop_pre_header
      _
    $region3: #{vae_forward_step.1} parent=1 // loop_header
      %s37 = sphi 0, %s41
      %p38 = scmp.ge.s32.totalorder %s37, 6
      %s44 = sphi 0, %s56
      %s45 = sphi 0, %s52
      %s46 = sphi 0, %s44
      %s47 = sphi 0, %s45
      %s48 = sphi 0, %s46
      %s49 = sphi 0, %s47
      %s61 = sphi 0, %s63
      %s64 = sphi 0, %s61
      %s65 = sphi 0, %s64
      %s81 = sphi 0, %s65
      %s89 = sphi 0, %s91
      %s92 = sphi 0, %s89
      %s93 = sphi 0, %s92
      %s109 = sphi 0, %s93
      %s117 = sphi 0, %s119
      %s120 = sphi 0, %s117
      %s121 = sphi 0, %s120
      %s137 = sphi 0, %s121
      %s145 = sphi 0, %s147
      %s148 = sphi 0, %s145
      %s149 = sphi 0, %s148
      %s165 = sphi 0, %s149
      %s169 = sphi 0, %s169
      %s171 = sphi 0, %s169
      %s172 = sphi 0, %s171
      %s186 = sphi 0, %s172
      %s190 = sphi 0, %s190
      %s192 = sphi 0, %s190
      %s193 = sphi 0, %s192
      %s207 = sphi 0, %s193
      %s211 = sphi 0, %s211
      %s213 = sphi 0, %s211
      %s214 = sphi 0, %s213
      %s228 = sphi 0, %s214
      %s232 = sphi 0, %s232
      %s234 = sphi 0, %s232
      %s235 = sphi 0, %s234
      %s249 = sphi 0, %s235
      %s253 = sphi 0, %s253
      %s255 = sphi 0, %s253
      %s256 = sphi 0, %s255
      %s270 = sphi 0, %s256
      %s274 = sphi 0, %s274
      %s276 = sphi 0, %s274
      %s277 = sphi 0, %s276
      %s291 = sphi 0, %s277
      %s295 = sphi 0, %s295
      %s297 = sphi 0, %s295
      %s298 = sphi 0, %s297
      %s312 = sphi 0, %s298
      %s316 = sphi 0, %s316
      %s318 = sphi 0, %s316
      %s319 = sphi 0, %s318
      %s333 = sphi 0, %s319
      %s337 = sphi 0, %s337
      %s339 = sphi 0, %s337
      %s340 = sphi 0, %s339
      %s354 = sphi 0, %s340
      %s358 = sphi 0, %s358
      %s360 = sphi 0, %s358
      %s361 = sphi 0, %s360
      %s375 = sphi 0, %s361
      %s379 = sphi 0, %s379
      %s381 = sphi 0, %s379
      %s382 = sphi 0, %s381
      %s396 = sphi 0, %s382
      %s400 = sphi 0, %s400
      %s402 = sphi 0, %s400
      %s403 = sphi 0, %s402
      %s417 = sphi 0, %s403
      %s421 = sphi 0, %s421
      %s423 = sphi 0, %s421
      %s424 = sphi 0, %s423
      %s438 = sphi 0, %s424
      %s442 = sphi 0, %s442
      %s444 = sphi 0, %s442
      %s445 = sphi 0, %s444
      %s459 = sphi 0, %s445
      %s463 = sphi 0, %s463
      %s465 = sphi 0, %s463
      %s466 = sphi 0, %s465
      %s480 = sphi 0, %s466
      %s484 = sphi 0, %s484
      %s486 = sphi 0, %s484
      %s487 = sphi 0, %s486
      %s501 = sphi 0, %s487
      %s509 = sphi 0, %s511
      %s512 = sphi 0, %s509
      %s513 = sphi 0, %s512
      %s529 = sphi 0, %s513
      %s537 = sphi 0, %s539
      %s540 = sphi 0, %s537
      %s541 = sphi 0, %s540
      %s557 = sphi 0, %s541
      %s565 = sphi 0, %s567
      %s568 = sphi 0, %s565
      %s569 = sphi 0, %s568
      %s585 = sphi 0, %s569
      %s593 = sphi 0, %s595
      %s596 = sphi 0, %s593
      %s597 = sphi 0, %s596
      %s613 = sphi 0, %s597
      %s621 = sphi 0, %s623
      %s624 = sphi 0, %s621
      %s625 = sphi 0, %s624
      %s641 = sphi 0, %s625
    $region4: #{vae_forward_step.1} parent=1 // loop_header_branch
      %40 = sbr.rel (%p38) target = $region8
    $region5: #{vae_forward_step.1} parent=1 // loop_body
      %s42 = ssub.s32 %s37, 1
      %s43 = ssub.s32 %s37, 2
      %s50 = sadd.s32 1, %s45
      %p51 = scmp.ge.s32.totalorder %s50, 2
      %s52 = scalar_select %p51, 0, %s50
      %s53 = sadd.s32 1, %s44
      %s54 = scalar_select %p51, %s53, %s44
      %p55 = scmp.ge.s32.totalorder %s54, 2
      %s56 = scalar_select %p55, 0, %s54
      %s57 = ssub.s32 %s44, %s56
      %s58 = ssub.s32 %s45, %s52
      %s59 = sor.u32 %s57, %s58
      %p60 = scmp.eq.s32.totalorder %s59, 0
      %s62 = sadd.s32 %s61, 1
      %s63 = scalar_select %p60, %s61, %s62
      %p66 = pneg %p60
      %p67 = scmp.eq.s32.totalorder %s37, 3
      %p68 = por %p66, %p67
      %p69 = scmp.ne.s32.totalorder %s61, %s64
      %p70 = scmp.eq.s32.totalorder %s37, 0
      %p71 = por %p69, %p70
      %p72 = scmp.ne.s32.totalorder %s61, %s64
      %p73 = scmp.eq.s32.totalorder %s42, 3
      %p74 = por %p72, %p73
      %p75 = scmp.ne.s32.totalorder %s64, %s65
      %p76 = scmp.eq.s32.totalorder %s42, 0
      %p77 = por %p75, %p76
      %p78 = scmp.ne.s32.totalorder %s64, %s65
      %p79 = scmp.eq.s32.totalorder %s43, 3
      %p80 = por %p78, %p79
      %p82 = scmp.ne.s32.totalorder %s65, %s81
      %p83 = scmp.eq.s32.totalorder %s43, 0
      %p84 = por %p82, %p83
      %s85 = ssub.s32 %s44, %s56
      %s86 = ssub.s32 %s45, %s52
      %s87 = sor.u32 %s85, %s86
      %p88 = scmp.eq.s32.totalorder %s87, 0
      %s90 = sadd.s32 %s89, 1
      %s91 = scalar_select %p88, %s89, %s90
      %p94 = pneg %p88
      %p95 = scmp.eq.s32.totalorder %s37, 3
      %p96 = por %p94, %p95
      %p97 = scmp.ne.s32.totalorder %s89, %s92
      %p98 = scmp.eq.s32.totalorder %s37, 0
      %p99 = por %p97, %p98
      %p100 = scmp.ne.s32.totalorder %s89, %s92
      %p101 = scmp.eq.s32.totalorder %s42, 3
      %p102 = por %p100, %p101
      %p103 = scmp.ne.s32.totalorder %s92, %s93
      %p104 = scmp.eq.s32.totalorder %s42, 0
      %p105 = por %p103, %p104
      %p106 = scmp.ne.s32.totalorder %s92, %s93
      %p107 = scmp.eq.s32.totalorder %s43, 3
      %p108 = por %p106, %p107
      %p110 = scmp.ne.s32.totalorder %s93, %s109
      %p111 = scmp.eq.s32.totalorder %s43, 0
      %p112 = por %p110, %p111
      %s113 = ssub.s32 %s44, %s56
      %s114 = ssub.s32 %s45, %s52
      %s115 = sor.u32 %s113, %s114
      %p116 = scmp.eq.s32.totalorder %s115, 0
      %s118 = sadd.s32 %s117, 1
      %s119 = scalar_select %p116, %s117, %s118
      %p122 = pneg %p116
      %p123 = scmp.eq.s32.totalorder %s37, 3
      %p124 = por %p122, %p123
      %p125 = scmp.ne.s32.totalorder %s117, %s120
      %p126 = scmp.eq.s32.totalorder %s37, 0
      %p127 = por %p125, %p126
      %p128 = scmp.ne.s32.totalorder %s117, %s120
      %p129 = scmp.eq.s32.totalorder %s42, 3
      %p130 = por %p128, %p129
      %p131 = scmp.ne.s32.totalorder %s120, %s121
      %p132 = scmp.eq.s32.totalorder %s42, 0
      %p133 = por %p131, %p132
      %p134 = scmp.ne.s32.totalorder %s120, %s121
      %p135 = scmp.eq.s32.totalorder %s43, 3
      %p136 = por %p134, %p135
      %p138 = scmp.ne.s32.totalorder %s121, %s137
      %p139 = scmp.eq.s32.totalorder %s43, 0
      %p140 = por %p138, %p139
      %s141 = ssub.s32 %s44, %s56
      %s142 = ssub.s32 %s45, %s52
      %s143 = sor.u32 %s141, %s142
      %p144 = scmp.eq.s32.totalorder %s143, 0
      %s146 = sadd.s32 %s145, 1
      %s147 = scalar_select %p144, %s145, %s146
      %p150 = pneg %p144
      %p151 = scmp.eq.s32.totalorder %s37, 3
      %p152 = por %p150, %p151
      %p153 = scmp.ne.s32.totalorder %s145, %s148
      %p154 = scmp.eq.s32.totalorder %s37, 0
      %p155 = por %p153, %p154
      %p156 = scmp.ne.s32.totalorder %s145, %s148
      %p157 = scmp.eq.s32.totalorder %s42, 3
      %p158 = por %p156, %p157
      %p159 = scmp.ne.s32.totalorder %s148, %s149
      %p160 = scmp.eq.s32.totalorder %s42, 0
      %p161 = por %p159, %p160
      %p162 = scmp.ne.s32.totalorder %s148, %s149
      %p163 = scmp.eq.s32.totalorder %s43, 3
      %p164 = por %p162, %p163
      %p166 = scmp.ne.s32.totalorder %s149, %s165
      %p167 = scmp.eq.s32.totalorder %s43, 0
      %p168 = por %p166, %p167
      %s170 = sadd.s32 %s169, 1
      %p173 = scmp.eq.s32.totalorder %s37, 3
      %p174 = scmp.ne.s32.totalorder %s169, %s171
      %p175 = scmp.eq.s32.totalorder %s37, 0
      %p176 = por %p174, %p175
      %p177 = scmp.ne.s32.totalorder %s169, %s171
      %p178 = scmp.eq.s32.totalorder %s42, 3
      %p179 = por %p177, %p178
      %p180 = scmp.ne.s32.totalorder %s171, %s172
      %p181 = scmp.eq.s32.totalorder %s42, 0
      %p182 = por %p180, %p181
      %p183 = scmp.ne.s32.totalorder %s171, %s172
      %p184 = scmp.eq.s32.totalorder %s43, 3
      %p185 = por %p183, %p184
      %p187 = scmp.ne.s32.totalorder %s172, %s186
      %p188 = scmp.eq.s32.totalorder %s43, 0
      %p189 = por %p187, %p188
      %s191 = sadd.s32 %s190, 1
      %p194 = scmp.eq.s32.totalorder %s37, 3
      %p195 = scmp.ne.s32.totalorder %s190, %s192
      %p196 = scmp.eq.s32.totalorder %s37, 0
      %p197 = por %p195, %p196
      %p198 = scmp.ne.s32.totalorder %s190, %s192
      %p199 = scmp.eq.s32.totalorder %s42, 3
      %p200 = por %p198, %p199
      %p201 = scmp.ne.s32.totalorder %s192, %s193
      %p202 = scmp.eq.s32.totalorder %s42, 0
      %p203 = por %p201, %p202
      %p204 = scmp.ne.s32.totalorder %s192, %s193
      %p205 = scmp.eq.s32.totalorder %s43, 3
      %p206 = por %p204, %p205
      %p208 = scmp.ne.s32.totalorder %s193, %s207
      %p209 = scmp.eq.s32.totalorder %s43, 0
      %p210 = por %p208, %p209
      %s212 = sadd.s32 %s211, 1
      %p215 = scmp.eq.s32.totalorder %s37, 3
      %p216 = scmp.ne.s32.totalorder %s211, %s213
      %p217 = scmp.eq.s32.totalorder %s37, 0
      %p218 = por %p216, %p217
      %p219 = scmp.ne.s32.totalorder %s211, %s213
      %p220 = scmp.eq.s32.totalorder %s42, 3
      %p221 = por %p219, %p220
      %p222 = scmp.ne.s32.totalorder %s213, %s214
      %p223 = scmp.eq.s32.totalorder %s42, 0
      %p224 = por %p222, %p223
      %p225 = scmp.ne.s32.totalorder %s213, %s214
      %p226 = scmp.eq.s32.totalorder %s43, 3
      %p227 = por %p225, %p226
      %p229 = scmp.ne.s32.totalorder %s214, %s228
      %p230 = scmp.eq.s32.totalorder %s43, 0
      %p231 = por %p229, %p230
      %s233 = sadd.s32 %s232, 1
      %p236 = scmp.eq.s32.totalorder %s37, 3
      %p237 = scmp.ne.s32.totalorder %s232, %s234
      %p238 = scmp.eq.s32.totalorder %s37, 0
      %p239 = por %p237, %p238
      %p240 = scmp.ne.s32.totalorder %s232, %s234
      %p241 = scmp.eq.s32.totalorder %s42, 3
      %p242 = por %p240, %p241
      %p243 = scmp.ne.s32.totalorder %s234, %s235
      %p244 = scmp.eq.s32.totalorder %s42, 0
      %p245 = por %p243, %p244
      %p246 = scmp.ne.s32.totalorder %s234, %s235
      %p247 = scmp.eq.s32.totalorder %s43, 3
      %p248 = por %p246, %p247
      %p250 = scmp.ne.s32.totalorder %s235, %s249
      %p251 = scmp.eq.s32.totalorder %s43, 0
      %p252 = por %p250, %p251
      %s254 = sadd.s32 %s253, 1
      %p257 = scmp.eq.s32.totalorder %s37, 3
      %p258 = scmp.ne.s32.totalorder %s253, %s255
      %p259 = scmp.eq.s32.totalorder %s37, 0
      %p260 = por %p258, %p259
      %p261 = scmp.ne.s32.totalorder %s253, %s255
      %p262 = scmp.eq.s32.totalorder %s42, 3
      %p263 = por %p261, %p262
      %p264 = scmp.ne.s32.totalorder %s255, %s256
      %p265 = scmp.eq.s32.totalorder %s42, 0
      %p266 = por %p264, %p265
      %p267 = scmp.ne.s32.totalorder %s255, %s256
      %p268 = scmp.eq.s32.totalorder %s43, 3
      %p269 = por %p267, %p268
      %p271 = scmp.ne.s32.totalorder %s256, %s270
      %p272 = scmp.eq.s32.totalorder %s43, 0
      %p273 = por %p271, %p272
      %s275 = sadd.s32 %s274, 1
      %p278 = scmp.eq.s32.totalorder %s37, 3
      %p279 = scmp.ne.s32.totalorder %s274, %s276
      %p280 = scmp.eq.s32.totalorder %s37, 0
      %p281 = por %p279, %p280
      %p282 = scmp.ne.s32.totalorder %s274, %s276
      %p283 = scmp.eq.s32.totalorder %s42, 3
      %p284 = por %p282, %p283
      %p285 = scmp.ne.s32.totalorder %s276, %s277
      %p286 = scmp.eq.s32.totalorder %s42, 0
      %p287 = por %p285, %p286
      %p288 = scmp.ne.s32.totalorder %s276, %s277
      %p289 = scmp.eq.s32.totalorder %s43, 3
      %p290 = por %p288, %p289
      %p292 = scmp.ne.s32.totalorder %s277, %s291
      %p293 = scmp.eq.s32.totalorder %s43, 0
      %p294 = por %p292, %p293
      %s296 = sadd.s32 %s295, 1
      %p299 = scmp.eq.s32.totalorder %s37, 3
      %p300 = scmp.ne.s32.totalorder %s295, %s297
      %p301 = scmp.eq.s32.totalorder %s37, 0
      %p302 = por %p300, %p301
      %p303 = scmp.ne.s32.totalorder %s295, %s297
      %p304 = scmp.eq.s32.totalorder %s42, 3
      %p305 = por %p303, %p304
      %p306 = scmp.ne.s32.totalorder %s297, %s298
      %p307 = scmp.eq.s32.totalorder %s42, 0
      %p308 = por %p306, %p307
      %p309 = scmp.ne.s32.totalorder %s297, %s298
      %p310 = scmp.eq.s32.totalorder %s43, 3
      %p311 = por %p309, %p310
      %p313 = scmp.ne.s32.totalorder %s298, %s312
      %p314 = scmp.eq.s32.totalorder %s43, 0
      %p315 = por %p313, %p314
      %s317 = sadd.s32 %s316, 1
      %p320 = scmp.eq.s32.totalorder %s37, 3
      %p321 = scmp.ne.s32.totalorder %s316, %s318
      %p322 = scmp.eq.s32.totalorder %s37, 0
      %p323 = por %p321, %p322
      %p324 = scmp.ne.s32.totalorder %s316, %s318
      %p325 = scmp.eq.s32.totalorder %s42, 3
      %p326 = por %p324, %p325
      %p327 = scmp.ne.s32.totalorder %s318, %s319
      %p328 = scmp.eq.s32.totalorder %s42, 0
      %p329 = por %p327, %p328
      %p330 = scmp.ne.s32.totalorder %s318, %s319
      %p331 = scmp.eq.s32.totalorder %s43, 3
      %p332 = por %p330, %p331
      %p334 = scmp.ne.s32.totalorder %s319, %s333
      %p335 = scmp.eq.s32.totalorder %s43, 0
      %p336 = por %p334, %p335
      %s338 = sadd.s32 %s337, 1
      %p341 = scmp.eq.s32.totalorder %s37, 3
      %p342 = scmp.ne.s32.totalorder %s337, %s339
      %p343 = scmp.eq.s32.totalorder %s37, 0
      %p344 = por %p342, %p343
      %p345 = scmp.ne.s32.totalorder %s337, %s339
      %p346 = scmp.eq.s32.totalorder %s42, 3
      %p347 = por %p345, %p346
      %p348 = scmp.ne.s32.totalorder %s339, %s340
      %p349 = scmp.eq.s32.totalorder %s42, 0
      %p350 = por %p348, %p349
      %p351 = scmp.ne.s32.totalorder %s339, %s340
      %p352 = scmp.eq.s32.totalorder %s43, 3
      %p353 = por %p351, %p352
      %p355 = scmp.ne.s32.totalorder %s340, %s354
      %p356 = scmp.eq.s32.totalorder %s43, 0
      %p357 = por %p355, %p356
      %s359 = sadd.s32 %s358, 1
      %p362 = scmp.eq.s32.totalorder %s37, 3
      %p363 = scmp.ne.s32.totalorder %s358, %s360
      %p364 = scmp.eq.s32.totalorder %s37, 0
      %p365 = por %p363, %p364
      %p366 = scmp.ne.s32.totalorder %s358, %s360
      %p367 = scmp.eq.s32.totalorder %s42, 3
      %p368 = por %p366, %p367
      %p369 = scmp.ne.s32.totalorder %s360, %s361
      %p370 = scmp.eq.s32.totalorder %s42, 0
      %p371 = por %p369, %p370
      %p372 = scmp.ne.s32.totalorder %s360, %s361
      %p373 = scmp.eq.s32.totalorder %s43, 3
      %p374 = por %p372, %p373
      %p376 = scmp.ne.s32.totalorder %s361, %s375
      %p377 = scmp.eq.s32.totalorder %s43, 0
      %p378 = por %p376, %p377
      %s380 = sadd.s32 %s379, 1
      %p383 = scmp.eq.s32.totalorder %s37, 3
      %p384 = scmp.ne.s32.totalorder %s379, %s381
      %p385 = scmp.eq.s32.totalorder %s37, 0
      %p386 = por %p384, %p385
      %p387 = scmp.ne.s32.totalorder %s379, %s381
      %p388 = scmp.eq.s32.totalorder %s42, 3
      %p389 = por %p387, %p388
      %p390 = scmp.ne.s32.totalorder %s381, %s382
      %p391 = scmp.eq.s32.totalorder %s42, 0
      %p392 = por %p390, %p391
      %p393 = scmp.ne.s32.totalorder %s381, %s382
      %p394 = scmp.eq.s32.totalorder %s43, 3
      %p395 = por %p393, %p394
      %p397 = scmp.ne.s32.totalorder %s382, %s396
      %p398 = scmp.eq.s32.totalorder %s43, 0
      %p399 = por %p397, %p398
      %s401 = sadd.s32 %s400, 1
      %p404 = scmp.eq.s32.totalorder %s37, 3
      %p405 = scmp.ne.s32.totalorder %s400, %s402
      %p406 = scmp.eq.s32.totalorder %s37, 0
      %p407 = por %p405, %p406
      %p408 = scmp.ne.s32.totalorder %s400, %s402
      %p409 = scmp.eq.s32.totalorder %s42, 3
      %p410 = por %p408, %p409
      %p411 = scmp.ne.s32.totalorder %s402, %s403
      %p412 = scmp.eq.s32.totalorder %s42, 0
      %p413 = por %p411, %p412
      %p414 = scmp.ne.s32.totalorder %s402, %s403
      %p415 = scmp.eq.s32.totalorder %s43, 3
      %p416 = por %p414, %p415
      %p418 = scmp.ne.s32.totalorder %s403, %s417
      %p419 = scmp.eq.s32.totalorder %s43, 0
      %p420 = por %p418, %p419
      %s422 = sadd.s32 %s421, 1
      %p425 = scmp.eq.s32.totalorder %s37, 3
      %p426 = scmp.ne.s32.totalorder %s421, %s423
      %p427 = scmp.eq.s32.totalorder %s37, 0
      %p428 = por %p426, %p427
      %p429 = scmp.ne.s32.totalorder %s421, %s423
      %p430 = scmp.eq.s32.totalorder %s42, 3
      %p431 = por %p429, %p430
      %p432 = scmp.ne.s32.totalorder %s423, %s424
      %p433 = scmp.eq.s32.totalorder %s42, 0
      %p434 = por %p432, %p433
      %p435 = scmp.ne.s32.totalorder %s423, %s424
      %p436 = scmp.eq.s32.totalorder %s43, 3
      %p437 = por %p435, %p436
      %p439 = scmp.ne.s32.totalorder %s424, %s438
      %p440 = scmp.eq.s32.totalorder %s43, 0
      %p441 = por %p439, %p440
      %s443 = sadd.s32 %s442, 1
      %p446 = scmp.eq.s32.totalorder %s37, 3
      %p447 = scmp.ne.s32.totalorder %s442, %s444
      %p448 = scmp.eq.s32.totalorder %s37, 0
      %p449 = por %p447, %p448
      %p450 = scmp.ne.s32.totalorder %s442, %s444
      %p451 = scmp.eq.s32.totalorder %s42, 3
      %p452 = por %p450, %p451
      %p453 = scmp.ne.s32.totalorder %s444, %s445
      %p454 = scmp.eq.s32.totalorder %s42, 0
      %p455 = por %p453, %p454
      %p456 = scmp.ne.s32.totalorder %s444, %s445
      %p457 = scmp.eq.s32.totalorder %s43, 3
      %p458 = por %p456, %p457
      %p460 = scmp.ne.s32.totalorder %s445, %s459
      %p461 = scmp.eq.s32.totalorder %s43, 0
      %p462 = por %p460, %p461
      %s464 = sadd.s32 %s463, 1
      %p467 = scmp.eq.s32.totalorder %s37, 3
      %p468 = scmp.ne.s32.totalorder %s463, %s465
      %p469 = scmp.eq.s32.totalorder %s37, 0
      %p470 = por %p468, %p469
      %p471 = scmp.ne.s32.totalorder %s463, %s465
      %p472 = scmp.eq.s32.totalorder %s42, 3
      %p473 = por %p471, %p472
      %p474 = scmp.ne.s32.totalorder %s465, %s466
      %p475 = scmp.eq.s32.totalorder %s42, 0
      %p476 = por %p474, %p475
      %p477 = scmp.ne.s32.totalorder %s465, %s466
      %p478 = scmp.eq.s32.totalorder %s43, 3
      %p479 = por %p477, %p478
      %p481 = scmp.ne.s32.totalorder %s466, %s480
      %p482 = scmp.eq.s32.totalorder %s43, 0
      %p483 = por %p481, %p482
      %s485 = sadd.s32 %s484, 1
      %p488 = scmp.eq.s32.totalorder %s37, 3
      %p489 = scmp.ne.s32.totalorder %s484, %s486
      %p490 = scmp.eq.s32.totalorder %s37, 0
      %p491 = por %p489, %p490
      %p492 = scmp.ne.s32.totalorder %s484, %s486
      %p493 = scmp.eq.s32.totalorder %s42, 3
      %p494 = por %p492, %p493
      %p495 = scmp.ne.s32.totalorder %s486, %s487
      %p496 = scmp.eq.s32.totalorder %s42, 0
      %p497 = por %p495, %p496
      %p498 = scmp.ne.s32.totalorder %s486, %s487
      %p499 = scmp.eq.s32.totalorder %s43, 3
      %p500 = por %p498, %p499
      %p502 = scmp.ne.s32.totalorder %s487, %s501
      %p503 = scmp.eq.s32.totalorder %s43, 0
      %p504 = por %p502, %p503
      %s505 = ssub.s32 %s44, %s56
      %s506 = ssub.s32 %s45, %s52
      %s507 = sor.u32 %s505, %s506
      %p508 = scmp.eq.s32.totalorder %s507, 0
      %s510 = sadd.s32 %s509, 1
      %s511 = scalar_select %p508, %s509, %s510
      %p514 = pneg %p508
      %p515 = scmp.eq.s32.totalorder %s37, 3
      %p516 = por %p514, %p515
      %p517 = scmp.ne.s32.totalorder %s509, %s512
      %p518 = scmp.eq.s32.totalorder %s37, 0
      %p519 = por %p517, %p518
      %p520 = scmp.ne.s32.totalorder %s509, %s512
      %p521 = scmp.eq.s32.totalorder %s42, 3
      %p522 = por %p520, %p521
      %p523 = scmp.ne.s32.totalorder %s512, %s513
      %p524 = scmp.eq.s32.totalorder %s42, 0
      %p525 = por %p523, %p524
      %p526 = scmp.ne.s32.totalorder %s512, %s513
      %p527 = scmp.eq.s32.totalorder %s43, 3
      %p528 = por %p526, %p527
      %p530 = scmp.ne.s32.totalorder %s513, %s529
      %p531 = scmp.eq.s32.totalorder %s43, 0
      %p532 = por %p530, %p531
      %s533 = ssub.s32 %s44, %s56
      %s534 = ssub.s32 %s45, %s52
      %s535 = sor.u32 %s533, %s534
      %p536 = scmp.eq.s32.totalorder %s535, 0
      %s538 = sadd.s32 %s537, 1
      %s539 = scalar_select %p536, %s537, %s538
      %p542 = pneg %p536
      %p543 = scmp.eq.s32.totalorder %s37, 3
      %p544 = por %p542, %p543
      %p545 = scmp.ne.s32.totalorder %s537, %s540
      %p546 = scmp.eq.s32.totalorder %s37, 0
      %p547 = por %p545, %p546
      %p548 = scmp.ne.s32.totalorder %s537, %s540
      %p549 = scmp.eq.s32.totalorder %s42, 3
      %p550 = por %p548, %p549
      %p551 = scmp.ne.s32.totalorder %s540, %s541
      %p552 = scmp.eq.s32.totalorder %s42, 0
      %p553 = por %p551, %p552
      %p554 = scmp.ne.s32.totalorder %s540, %s541
      %p555 = scmp.eq.s32.totalorder %s43, 3
      %p556 = por %p554, %p555
      %p558 = scmp.ne.s32.totalorder %s541, %s557
      %p559 = scmp.eq.s32.totalorder %s43, 0
      %p560 = por %p558, %p559
      %s561 = ssub.s32 %s44, %s56
      %s562 = ssub.s32 %s45, %s52
      %s563 = sor.u32 %s561, %s562
      %p564 = scmp.eq.s32.totalorder %s563, 0
      %s566 = sadd.s32 %s565, 1
      %s567 = scalar_select %p564, %s565, %s566
      %p570 = pneg %p564
      %p571 = scmp.eq.s32.totalorder %s37, 3
      %p572 = por %p570, %p571
      %p573 = scmp.ne.s32.totalorder %s565, %s568
      %p574 = scmp.eq.s32.totalorder %s37, 0
      %p575 = por %p573, %p574
      %p576 = scmp.ne.s32.totalorder %s565, %s568
      %p577 = scmp.eq.s32.totalorder %s42, 3
      %p578 = por %p576, %p577
      %p579 = scmp.ne.s32.totalorder %s568, %s569
      %p580 = scmp.eq.s32.totalorder %s42, 0
      %p581 = por %p579, %p580
      %p582 = scmp.ne.s32.totalorder %s568, %s569
      %p583 = scmp.eq.s32.totalorder %s43, 3
      %p584 = por %p582, %p583
      %p586 = scmp.ne.s32.totalorder %s569, %s585
      %p587 = scmp.eq.s32.totalorder %s43, 0
      %p588 = por %p586, %p587
      %s589 = ssub.s32 %s44, %s56
      %s590 = ssub.s32 %s45, %s52
      %s591 = sor.u32 %s589, %s590
      %p592 = scmp.eq.s32.totalorder %s591, 0
      %s594 = sadd.s32 %s593, 1
      %s595 = scalar_select %p592, %s593, %s594
      %p598 = pneg %p592
      %p599 = scmp.eq.s32.totalorder %s37, 3
      %p600 = por %p598, %p599
      %p601 = scmp.ne.s32.totalorder %s593, %s596
      %p602 = scmp.eq.s32.totalorder %s37, 0
      %p603 = por %p601, %p602
      %p604 = scmp.ne.s32.totalorder %s593, %s596
      %p605 = scmp.eq.s32.totalorder %s42, 3
      %p606 = por %p604, %p605
      %p607 = scmp.ne.s32.totalorder %s596, %s597
      %p608 = scmp.eq.s32.totalorder %s42, 0
      %p609 = por %p607, %p608
      %p610 = scmp.ne.s32.totalorder %s596, %s597
      %p611 = scmp.eq.s32.totalorder %s43, 3
      %p612 = por %p610, %p611
      %p614 = scmp.ne.s32.totalorder %s597, %s613
      %p615 = scmp.eq.s32.totalorder %s43, 0
      %p616 = por %p614, %p615
      %s617 = ssub.s32 %s44, %s56
      %s618 = ssub.s32 %s45, %s52
      %s619 = sor.u32 %s617, %s618
      %p620 = scmp.eq.s32.totalorder %s619, 0
      %s622 = sadd.s32 %s621, 1
      %s623 = scalar_select %p620, %s621, %s622
      %p626 = pneg %p620
      %p627 = scmp.eq.s32.totalorder %s37, 3
      %p628 = por %p626, %p627
      %p629 = scmp.ne.s32.totalorder %s621, %s624
      %p630 = scmp.eq.s32.totalorder %s37, 0
      %p631 = por %p629, %p630
      %p632 = scmp.ne.s32.totalorder %s621, %s624
      %p633 = scmp.eq.s32.totalorder %s42, 3
      %p634 = por %p632, %p633
      %p635 = scmp.ne.s32.totalorder %s624, %s625
      %p636 = scmp.eq.s32.totalorder %s42, 0
      %p637 = por %p635, %p636
      %p638 = scmp.ne.s32.totalorder %s624, %s625
      %p639 = scmp.eq.s32.totalorder %s43, 3
      %p640 = por %p638, %p639
      %p642 = scmp.ne.s32.totalorder %s625, %s641
      %p643 = scmp.eq.s32.totalorder %s43, 0
      %p644 = por %p642, %p643
      %p645 = scmp.le.s32.totalorder 1, %s37
      %p646 = scmp.lt.s32.totalorder %s37, 5
      %p647 = pnand %p645, %p646
      %p648 = pneg %p647
      // Predicated region
      $region9: #{vae_forward_step.1} parent=5 // pred_check
        _
      $region10: #{vae_forward_step.1} parent=5 // pred_check_branch
        %650 = sbr.rel (%p647) target = $region12
      $region11: #{vae_forward_step.1} parent=5 // pred_region
        %s651 = ssub.s32 %s37, 1
        // Predicated region
        $region13: #{vae_forward_step.1} parent=11 // pred_check
          %p652 = pneg %p182
        $region14: #{vae_forward_step.1} parent=11 // pred_check_branch
          %654 = sbr.rel (%p652) target = $region16
        $region15: #{vae_forward_step.1} parent=11 // pred_region
          _
        $region16: #{vae_forward_step.1} parent=11 // pred_fallthru
          _
        // Predicated region
        $region17: #{vae_forward_step.1} parent=11 // pred_check
          %p655 = pneg %p203
        $region18: #{vae_forward_step.1} parent=11 // pred_check_branch
          %657 = sbr.rel (%p655) target = $region20
        $region19: #{vae_forward_step.1} parent=11 // pred_region
          _
        $region20: #{vae_forward_step.1} parent=11 // pred_fallthru
          _
        // Predicated region
        $region21: #{vae_forward_step.1} parent=11 // pred_check
          %p658 = pneg %p224
        $region22: #{vae_forward_step.1} parent=11 // pred_check_branch
          %660 = sbr.rel (%p658) target = $region24
        $region23: #{vae_forward_step.1} parent=11 // pred_region
          _
        $region24: #{vae_forward_step.1} parent=11 // pred_fallthru
          _
        // Predicated region
        $region25: #{vae_forward_step.1} parent=11 // pred_check
          %p661 = pneg %p245
        $region26: #{vae_forward_step.1} parent=11 // pred_check_branch
          %663 = sbr.rel (%p661) target = $region28
        $region27: #{vae_forward_step.1} parent=11 // pred_region
          _
        $region28: #{vae_forward_step.1} parent=11 // pred_fallthru
          _
        // Predicated region
        $region29: #{vae_forward_step.1} parent=11 // pred_check
          %p664 = pneg %p266
        $region30: #{vae_forward_step.1} parent=11 // pred_check_branch
          %666 = sbr.rel (%p664) target = $region32
        $region31: #{vae_forward_step.1} parent=11 // pred_region
          _
        $region32: #{vae_forward_step.1} parent=11 // pred_fallthru
          _
        // Predicated region
        $region33: #{vae_forward_step.1} parent=11 // pred_check
          %p667 = pneg %p287
        $region34: #{vae_forward_step.1} parent=11 // pred_check_branch
          %669 = sbr.rel (%p667) target = $region36
        $region35: #{vae_forward_step.1} parent=11 // pred_region
          _
        $region36: #{vae_forward_step.1} parent=11 // pred_fallthru
          _
        // Predicated region
        $region37: #{vae_forward_step.1} parent=11 // pred_check
          %p670 = pneg %p308
        $region38: #{vae_forward_step.1} parent=11 // pred_check_branch
          %672 = sbr.rel (%p670) target = $region40
        $region39: #{vae_forward_step.1} parent=11 // pred_region
          _
        $region40: #{vae_forward_step.1} parent=11 // pred_fallthru
          _
        // Predicated region
        $region41: #{vae_forward_step.1} parent=11 // pred_check
          %p673 = pneg %p329
        $region42: #{vae_forward_step.1} parent=11 // pred_check_branch
          %675 = sbr.rel (%p673) target = $region44
        $region43: #{vae_forward_step.1} parent=11 // pred_region
          _
        $region44: #{vae_forward_step.1} parent=11 // pred_fallthru
          _
        // Predicated region
        $region45: #{vae_forward_step.1} parent=11 // pred_check
          %p676 = pneg %p350
        $region46: #{vae_forward_step.1} parent=11 // pred_check_branch
          %678 = sbr.rel (%p676) target = $region48
        $region47: #{vae_forward_step.1} parent=11 // pred_region
          _
        $region48: #{vae_forward_step.1} parent=11 // pred_fallthru
          _
        // Predicated region
        $region49: #{vae_forward_step.1} parent=11 // pred_check
          %p679 = pneg %p371
        $region50: #{vae_forward_step.1} parent=11 // pred_check_branch
          %681 = sbr.rel (%p679) target = $region52
        $region51: #{vae_forward_step.1} parent=11 // pred_region
          _
        $region52: #{vae_forward_step.1} parent=11 // pred_fallthru
          _
        // Predicated region
        $region53: #{vae_forward_step.1} parent=11 // pred_check
          %p682 = pneg %p392
        $region54: #{vae_forward_step.1} parent=11 // pred_check_branch
          %684 = sbr.rel (%p682) target = $region56
        $region55: #{vae_forward_step.1} parent=11 // pred_region
          _
        $region56: #{vae_forward_step.1} parent=11 // pred_fallthru
          _
        // Predicated region
        $region57: #{vae_forward_step.1} parent=11 // pred_check
          %p685 = pneg %p413
        $region58: #{vae_forward_step.1} parent=11 // pred_check_branch
          %687 = sbr.rel (%p685) target = $region60
        $region59: #{vae_forward_step.1} parent=11 // pred_region
          _
        $region60: #{vae_forward_step.1} parent=11 // pred_fallthru
          _
        // Predicated region
        $region61: #{vae_forward_step.1} parent=11 // pred_check
          %p688 = pneg %p434
        $region62: #{vae_forward_step.1} parent=11 // pred_check_branch
          %690 = sbr.rel (%p688) target = $region64
        $region63: #{vae_forward_step.1} parent=11 // pred_region
          _
        $region64: #{vae_forward_step.1} parent=11 // pred_fallthru
          _
        // Predicated region
        $region65: #{vae_forward_step.1} parent=11 // pred_check
          %p691 = pneg %p455
        $region66: #{vae_forward_step.1} parent=11 // pred_check_branch
          %693 = sbr.rel (%p691) target = $region68
        $region67: #{vae_forward_step.1} parent=11 // pred_region
          _
        $region68: #{vae_forward_step.1} parent=11 // pred_fallthru
          _
        // Predicated region
        $region69: #{vae_forward_step.1} parent=11 // pred_check
          %p694 = pneg %p476
        $region70: #{vae_forward_step.1} parent=11 // pred_check_branch
          %696 = sbr.rel (%p694) target = $region72
        $region71: #{vae_forward_step.1} parent=11 // pred_region
          _
        $region72: #{vae_forward_step.1} parent=11 // pred_fallthru
          _
        // Predicated region
        $region73: #{vae_forward_step.1} parent=11 // pred_check
          %p697 = pneg %p497
        $region74: #{vae_forward_step.1} parent=11 // pred_check_branch
          %699 = sbr.rel (%p697) target = $region76
        $region75: #{vae_forward_step.1} parent=11 // pred_region
          _
        $region76: #{vae_forward_step.1} parent=11 // pred_fallthru
          _
      $region12: #{vae_forward_step.1} parent=5 // pred_fallthru
        _
      %p700 = scmp.lt.s32.totalorder %s37, 4
      // Predicated region
      $region77: #{vae_forward_step.1} parent=5 // pred_check
        %p701 = pneg %p700
      $region78: #{vae_forward_step.1} parent=5 // pred_check_branch
        %703 = sbr.rel (%p701) target = $region80
      $region79: #{vae_forward_step.1} parent=5 // pred_region
        // Predicated region
        $region81: #{vae_forward_step.1} parent=79 // pred_check
          %p704 = pneg %p71
        $region82: #{vae_forward_step.1} parent=79 // pred_check_branch
          %706 = sbr.rel (%p704) target = $region84
        $region83: #{vae_forward_step.1} parent=79 // pred_region
          %p707 = scmp.lt.s32.totalorder %s44, 1
          %s708 = scalar_select %p707, %s44, 1
          %p709 = scmp.lt.s32.totalorder %s45, 1
          %s710 = scalar_select %p709, %s45, 1
          %s711 = smul.addr %s708, 2
          %s712 = sadd.s32 %s710, %s711
          %s713 = smul.addr %s712, 2
          %s714 = scalar_lea.vmem %s0, %s713
        $region84: #{vae_forward_step.1} parent=79 // pred_fallthru
          _
        // Predicated region
        $region85: #{vae_forward_step.1} parent=79 // pred_check
          %p715 = pneg %p99
        $region86: #{vae_forward_step.1} parent=79 // pred_check_branch
          %717 = sbr.rel (%p715) target = $region88
        $region87: #{vae_forward_step.1} parent=79 // pred_region
          %p718 = scmp.lt.s32.totalorder %s44, 1
          %s719 = scalar_select %p718, %s44, 1
          %p720 = scmp.lt.s32.totalorder %s45, 1
          %s721 = scalar_select %p720, %s45, 1
          %s722 = smul.addr %s719, 2
          %s723 = sadd.s32 %s721, %s722
          %s724 = smul.addr %s723, 2
          %s725 = scalar_lea.vmem %s1, %s724
        $region88: #{vae_forward_step.1} parent=79 // pred_fallthru
          _
        // Predicated region
        $region89: #{vae_forward_step.1} parent=79 // pred_check
          %p726 = pneg %p127
        $region90: #{vae_forward_step.1} parent=79 // pred_check_branch
          %728 = sbr.rel (%p726) target = $region92
        $region91: #{vae_forward_step.1} parent=79 // pred_region
          %p729 = scmp.lt.s32.totalorder %s44, 1
          %s730 = scalar_select %p729, %s44, 1
          %p731 = scmp.lt.s32.totalorder %s45, 1
          %s732 = scalar_select %p731, %s45, 1
          %s733 = smul.addr %s730, 2
          %s734 = sadd.s32 %s732, %s733
          %s735 = smul.addr %s734, 2
          %s736 = scalar_lea.vmem %s2, %s735
        $region92: #{vae_forward_step.1} parent=79 // pred_fallthru
          _
        // Predicated region
        $region93: #{vae_forward_step.1} parent=79 // pred_check
          %p737 = pneg %p155
        $region94: #{vae_forward_step.1} parent=79 // pred_check_branch
          %739 = sbr.rel (%p737) target = $region96
        $region95: #{vae_forward_step.1} parent=79 // pred_region
          %s740 = sand.u32 %s145, 1
          %s741 = sand.u32 %s145, 1
          %s742 = smul.addr %s741, 8
          %s743 = scalar_lea.vmem [#allocation2], %s742
          %s744 = smul.addr %s44, 4
          %s745 = sadd.s32 %s45, %s744
          %s746 = smul.addr %s745, 4
          %s747 = scalar_lea.vmem %s3, %s746
          // Predicated region
          $region97: #{vae_forward_step.1} parent=95 // pred_check
            _
          $region98: #{vae_forward_step.1} parent=95 // pred_check_branch
            %749 = sbr.rel (0) target = $region100
          $region99: #{vae_forward_step.1} parent=95 // pred_region
            // Predicated region
            $region101: #{vae_forward_step.1} parent=99 // pred_check
              _
            $region102: #{vae_forward_step.1} parent=99 // pred_check_branch
              %751 = sbr.rel target = $region104
            $region103: #{vae_forward_step.1} parent=99 // pred_region
              // Predicated region
              $region116: #{vae_forward_step.1} parent=103 // pred_check
                _
              $region117: #{vae_forward_step.1} parent=103 // pred_check_branch
                %769 = sbr.rel (0) target = $region119
              $region118: #{vae_forward_step.1} parent=103 // pred_region
                loop: start=0, step=1, limit=1
                $region120: #{vae_forward_step.1} parent=118 // loop_pre_header
                  _
                $region121: #{vae_forward_step.1} parent=118 // loop_header
                  %s771 = sphi 0, %s775
                  %p772 = scmp.ge.s32.totalorder %s771, 1
                  %s776 = sphi %s747, %s747
                  %s777 = sphi %s743, %s743
                $region122: #{vae_forward_step.1} parent=118 // loop_header_branch
                  %774 = sbr.rel (%p772) target = $region126
                $region123: #{vae_forward_step.1} parent=118 // loop_body
                  _
                $region124: #{vae_forward_step.1} parent=118 // loop_footer
                  %s775 = sadd.s32 1, %s771
                $region125: #{vae_forward_step.1} parent=118 // loop_footer_branch
                  %770 = sbr.rel target = $region121
                $region126: #{vae_forward_step.1} parent=118 // loop_exit
                  _
                %s779 = ssub.s32 16, 1
                loop: start=0, step=1, limit=1
                $region127: #{vae_forward_step.1} parent=118 // loop_pre_header
                  _
                $region128: #{vae_forward_step.1} parent=118 // loop_header
                  %s781 = sphi 0, %s785
                  %p782 = scmp.ge.s32.totalorder %s781, 1
                  %s786 = sphi %s747, %s747
                  %s787 = sphi %s743, %s743
                $region129: #{vae_forward_step.1} parent=118 // loop_header_branch
                  %784 = sbr.rel (%p782) target = $region133
                $region130: #{vae_forward_step.1} parent=118 // loop_body
                  %v788 = vld [vmem:[%s786] sm:%s779]
                  %789 = vst [vmem:[%s787] sm:%s779] %v788
                  %v790 = vld [vmem:[%s786 + $0x8] sm:%s779]
                  %791 = vst [vmem:[%s787 + $0x4] sm:%s779] %v790
                $region131: #{vae_forward_step.1} parent=118 // loop_footer
                  %s785 = sadd.s32 1, %s781
                $region132: #{vae_forward_step.1} parent=118 // loop_footer_branch
                  %780 = sbr.rel target = $region128
                $region133: #{vae_forward_step.1} parent=118 // loop_exit
                  _
              $region119: #{vae_forward_step.1} parent=103 // pred_fallthru
                _
            $region104: #{vae_forward_step.1} parent=99 // pred_fallthru
              _
            // Predicated region
            $region105: #{vae_forward_step.1} parent=99 // pred_check
              _
            $region106: #{vae_forward_step.1} parent=99 // pred_check_branch
              %753 = sbr.rel (0) target = $region108
            $region107: #{vae_forward_step.1} parent=99 // pred_region
              %s755 = ssub.s32 16, 1
              loop: start=0, step=1, limit=1
              $region109: #{vae_forward_step.1} parent=107 // loop_pre_header
                _
              $region110: #{vae_forward_step.1} parent=107 // loop_header
                %s757 = sphi 0, %s761
                %p758 = scmp.ge.s32.totalorder %s757, 1
                %s762 = sphi %s747, %s747
                %s763 = sphi %s743, %s743
              $region111: #{vae_forward_step.1} parent=107 // loop_header_branch
                %760 = sbr.rel (%p758) target = $region115
              $region112: #{vae_forward_step.1} parent=107 // loop_body
                %v764 = vld [vmem:[%s762] sm:%s755]
                %765 = vst [vmem:[%s763] sm:%s755] %v764
                %v766 = vld [vmem:[%s762 + $0x8] sm:%s755]
                %767 = vst [vmem:[%s763 + $0x4] sm:%s755] %v766
              $region113: #{vae_forward_step.1} parent=107 // loop_footer
                %s761 = sadd.s32 1, %s757
              $region114: #{vae_forward_step.1} parent=107 // loop_footer_branch
                %756 = sbr.rel target = $region110
              $region115: #{vae_forward_step.1} parent=107 // loop_exit
                _
            $region108: #{vae_forward_step.1} parent=99 // pred_fallthru
              _
          $region100: #{vae_forward_step.1} parent=95 // pred_fallthru
            _
          %792 = vnop
        $region96: #{vae_forward_step.1} parent=79 // pred_fallthru
          _
      $region80: #{vae_forward_step.1} parent=5 // pred_fallthru
        _
      %p793 = scmp.le.s32.totalorder 1, %s37
      %p794 = scmp.lt.s32.totalorder %s37, 5
      %p795 = pnand %p793, %p794
      %p796 = pneg %p795
      // Predicated region
      $region134: #{vae_forward_step.1} parent=5 // pred_check
        _
      $region135: #{vae_forward_step.1} parent=5 // pred_check_branch
        %798 = sbr.rel (%p795) target = $region137
      $region136: #{vae_forward_step.1} parent=5 // pred_region
        %s799 = ssub.s32 %s37, 1
        %s800 = sand.u32 %s148, 1
        %s801 = sand.u32 %s148, 1
        %s802 = smul.addr %s801, 8
        %s803 = scalar_lea.vmem [#allocation2], %s802
        // Predicated region
        $region138: #{vae_forward_step.1} parent=136 // pred_check
          %p804 = pneg %p161
        $region139: #{vae_forward_step.1} parent=136 // pred_check_branch
          %806 = sbr.rel (%p804) target = $region141
        $region140: #{vae_forward_step.1} parent=136 // pred_region
          _
        $region141: #{vae_forward_step.1} parent=136 // pred_fallthru
          _
        %p807 = scmp.lt.s32.totalorder %s46, 1
        %s808 = scalar_select %p807, %s46, 1
        %p809 = scmp.lt.s32.totalorder %s47, 1
        %s810 = scalar_select %p809, %s47, 1
        %s811 = smul.addr %s808, 2
        %s812 = sadd.s32 %s810, %s811
        %s813 = smul.addr %s812, 2
        %s814 = scalar_lea.vmem %s0, %s813
        %p815 = pneg %p77
        %p816 = pneg %p74
        %p817 = scmp.lt.s32.totalorder %s46, 1
        %s818 = scalar_select %p817, %s46, 1
        %p819 = scmp.lt.s32.totalorder %s47, 1
        %s820 = scalar_select %p819, %s47, 1
        %s821 = smul.addr %s818, 2
        %s822 = sadd.s32 %s820, %s821
        %s823 = smul.addr %s822, 2
        %s824 = scalar_lea.vmem %s1, %s823
        %p825 = pneg %p105
        %p826 = pneg %p102
        %p827 = scmp.lt.s32.totalorder %s46, 1
        %s828 = scalar_select %p827, %s46, 1
        %p829 = scmp.lt.s32.totalorder %s47, 1
        %s830 = scalar_select %p829, %s47, 1
        %s831 = smul.addr %s828, 2
        %s832 = sadd.s32 %s830, %s831
        %s833 = smul.addr %s832, 2
        %s834 = scalar_lea.vmem %s2, %s833
        %p835 = pneg %p133
        %p836 = pneg %p130
        %s837 = sand.u32 %s148, 1
        %s838 = sand.u32 %s148, 1
        %s839 = smul.addr %s838, 8
        %s840 = scalar_lea.vmem [#allocation2], %s839
        %p841 = pneg %p161
        %p842 = pneg %p158
        %p843 = pneg %p182
        %p844 = pneg %p179
        %p845 = pneg %p203
        %p846 = pneg %p200
        %p847 = pneg %p224
        %p848 = pneg %p221
        %p849 = pneg %p245
        %p850 = pneg %p242
        %p851 = pneg %p266
        %p852 = pneg %p263
        %p853 = pneg %p287
        %p854 = pneg %p284
        %p855 = pneg %p308
        %p856 = pneg %p305
        %p857 = pneg %p329
        %p858 = pneg %p326
        %p859 = pneg %p350
        %p860 = pneg %p347
        %p861 = pneg %p371
        %p862 = pneg %p368
        %p863 = pneg %p392
        %p864 = pneg %p389
        %p865 = pneg %p413
        %p866 = pneg %p410
        %p867 = pneg %p434
        %p868 = pneg %p431
        %p869 = pneg %p455
        %p870 = pneg %p452
        %p871 = pneg %p476
        %p872 = pneg %p473
        %p873 = pneg %p497
        %p874 = pneg %p494
        %p875 = pneg %p525
        %p876 = pneg %p522
        %p877 = scmp.lt.s32.totalorder %s46, 1
        %s878 = scalar_select %p877, %s46, 1
        %p879 = scmp.lt.s32.totalorder %s47, 1
        %s880 = scalar_select %p879, %s47, 1
        %s881 = smul.addr %s878, 2
        %s882 = sadd.s32 %s880, %s881
        %s883 = smul.addr %s882, 4
        %s884 = scalar_lea.vmem %s20, %s883
        %p885 = pneg %p553
        %p886 = pneg %p550
        %s887 = sand.u32 %s540, 1
        %s888 = scalar_lea.sflag [#allocation4], %s887
        %s889 = sand.u32 %s540, 1
        %s890 = smul.addr %s889, 16
        %s891 = scalar_lea.vmem [#allocation3], %s890
        %p892 = pneg %p581
        %p893 = pneg %p578
        %s894 = sand.u32 %s568, 1
        %s895 = scalar_lea.sflag [#allocation6], %s894
        %s896 = sand.u32 %s568, 1
        %s897 = smul.addr %s896, 16
        %s898 = scalar_lea.vmem [#allocation5], %s897
        %p899 = pneg %p609
        %p900 = pneg %p606
        %p901 = scmp.lt.s32.totalorder %s46, 1
        %s902 = scalar_select %p901, %s46, 1
        %p903 = scmp.lt.s32.totalorder %s47, 1
        %s904 = scalar_select %p903, %s47, 1
        %s905 = smul.addr %s902, 2
        %s906 = sadd.s32 %s904, %s905
        %s907 = scalar_lea.vmem %s23, %s906
        %p908 = pneg %p637
        %p909 = pneg %p634
        %p910 = scmp.lt.s32.totalorder %s46, 1
        %s911 = scalar_select %p910, %s46, 1
        %p912 = scmp.lt.s32.totalorder %s47, 1
        %s913 = scalar_select %p912, %s47, 1
        %s914 = smul.addr %s911, 2
        %s915 = sadd.s32 %s913, %s914
        %s916 = scalar_lea.vmem %s24, %s915
        %p917 = scmp.lt.s32.totalorder %s46, 1
        %s918 = scalar_select %p917, %s46, 1
        %p919 = scmp.lt.s32.totalorder %s47, 1
        %s920 = scalar_select %p919, %s47, 1
        %s921 = smul.addr %s918, 2
        %s922 = sadd.s32 %s920, %s921
        %s923 = smul.addr %s922, 2
        %s924 = scalar_lea.vmem %s0, %s923
        %p925 = scmp.lt.s32.totalorder %s46, 1
        %s926 = scalar_select %p925, %s46, 1
        %p927 = scmp.lt.s32.totalorder %s47, 1
        %s928 = scalar_select %p927, %s47, 1
        %s929 = smul.addr %s926, 2
        %s930 = sadd.s32 %s928, %s929
        %s931 = smul.addr %s930, 2
        %s932 = scalar_lea.vmem %s1, %s931
        %p933 = scmp.lt.s32.totalorder %s46, 1
        %s934 = scalar_select %p933, %s46, 1
        %p935 = scmp.lt.s32.totalorder %s47, 1
        %s936 = scalar_select %p935, %s47, 1
        %s937 = smul.addr %s934, 2
        %s938 = sadd.s32 %s936, %s937
        %s939 = smul.addr %s938, 2
        %s940 = scalar_lea.vmem %s2, %s939
        %p941 = scmp.lt.s32.totalorder %s46, 1
        %s942 = scalar_select %p941, %s46, 1
        %p943 = scmp.lt.s32.totalorder %s47, 1
        %s944 = scalar_select %p943, %s47, 1
        %s945 = smul.addr %s942, 2
        %s946 = sadd.s32 %s944, %s945
        %s947 = smul.addr %s946, 4
        %s948 = scalar_lea.vmem %s20, %s947
        %p949 = scmp.lt.s32.totalorder %s46, 1
        %s950 = scalar_select %p949, %s46, 1
        %p951 = scmp.lt.s32.totalorder %s47, 1
        %s952 = scalar_select %p951, %s47, 1
        %s953 = smul.addr %s950, 2
        %s954 = sadd.s32 %s952, %s953
        %s955 = scalar_lea.vmem %s23, %s954
        %p956 = scmp.lt.s32.totalorder %s46, 1
        %s957 = scalar_select %p956, %s46, 1
        %p958 = scmp.lt.s32.totalorder %s47, 1
        %s959 = scalar_select %p958, %s47, 1
        %s960 = smul.addr %s957, 2
        %s961 = sadd.s32 %s959, %s960
        %s962 = scalar_lea.vmem %s24, %s961
        %v964 = vld [vmem:[%s924] sm:$0x3]
        %v965 = vld [vmem:[%s932] sm:$0x3]
        %v966 = vld [vmem:[%s940] sm:$0x3]
        %v967 = vld [vmem:[%s4] sm:$0xf]
        %v968 = vld [vmem:[%s4 + $0x4] sm:$0xf]
        %v969 = vld [vmem:[%s5] sm:$0xff]
        %v970 = vld [vmem:[%s5 + $0x8] sm:$0xff]
        %972 = vset.pattern.permute.xlu0 0
        %973 = vperm.xlu0 %972, %v969
        %v974 = vpop.permute.xlu0 %973
        %977 = vset.pattern.permute.xlu0 0
        %978 = vperm.xlu0 %977, %v970
        %v979 = vpop.permute.xlu0 %978
        %v983 = vunpack.c.l.b16 %v967
        %v984 = vunpack.c.l.b16 %v968
        %v985 = vpack.c.b16 %v984, %v983
        %vm986 = vcmask 23552
        %v988 = vsel %vm986, %v985, 0
        %vm990 = vcmask 1040384
        %vm991 = vcmask 1041408
        %v992 = vsel %vm990, 4294967295, 65535
        %v993 = vsel %vm991, %v992, 0
        %v995 = vand.u32 %v964, %v993
        %997 = vmatpush.bf16.msra.mxu0 0
        %998 = vmatpush.bf16.msra.mxu0 0
        %999 = vmatpush.bf16.msra.mxu0 0
        %1000 = vmatpush.bf16.msra.mxu0 0
        %1001 = vmatpush.bf16.msra.mxu0 0
        %1002 = vmatpush.bf16.msra.mxu0 0
        %1003 = vmatpush.bf16.msra.mxu0 0
        %1004 = vmatpush.bf16.msra.mxu0 %v995
        %1005 = vmatmul.bf16.gmra.mxu0 %v988
        %v1006 = vpop.f32.mrf.mxu0
        %v1007 = vadd.f32 %v974, %v1006
        %v1008 = vpop.f32.mrf.mxu0
        %v1009 = vadd.f32 %v979, %v1008
        %1010 = vdwg.mxu0
        %v1011 = vmax.f32 %v1007, 0.0
        %v1012 = vmax.f32 %v1009, 0.0
        %v1014 = vand.u32 %v965, %v993
        %1016 = vmatpush.bf16.msra.mxu0 0
        %1017 = vmatpush.bf16.msra.mxu0 0
        %1018 = vmatpush.bf16.msra.mxu0 0
        %1019 = vmatpush.bf16.msra.mxu0 0
        %1020 = vmatpush.bf16.msra.mxu0 0
        %1021 = vmatpush.bf16.msra.mxu0 0
        %1022 = vmatpush.bf16.msra.mxu0 0
        %1023 = vmatpush.bf16.msra.mxu0 %v1014
        %1024 = vmatmul.bf16.gmra.mxu0 %v988
        %v1025 = vpop.f32.mrf.mxu0
        %v1026 = vadd.f32 %v974, %v1025
        %v1027 = vpop.f32.mrf.mxu0
        %v1028 = vadd.f32 %v979, %v1027
        %1029 = vdwg.mxu0
        %v1030 = vmax.f32 %v1026, 0.0
        %v1031 = vmax.f32 %v1028, 0.0
        %v1032 = vld [vmem:[%s6] sm:$0xf]
        %v1033 = vld [vmem:[%s6 + $0x4] sm:$0xf]
        %v1034 = vld [vmem:[%s7] sm:$0xff]
        %v1035 = vld [vmem:[%s7 + $0x8] sm:$0xff]
        %1037 = vset.pattern.permute.xlu0 0
        %1038 = vperm.xlu0 %1037, %v1034
        %v1039 = vpop.permute.xlu0 %1038
        %1042 = vset.pattern.permute.xlu0 0
        %1043 = vperm.xlu0 %1042, %v1035
        %v1044 = vpop.permute.xlu0 %1043
        %v1048 = vunpack.c.l.b16 %v1032
        %v1049 = vunpack.c.l.b16 %v1033
        %v1050 = vpack.c.b16 %v1049, %v1048
        %v1052 = vsel %vm986, %v1050, 0
        %v1055 = vand.u32 %v966, %v993
        %1057 = vmatpush.bf16.msra.mxu0 0
        %1058 = vmatpush.bf16.msra.mxu0 0
        %1059 = vmatpush.bf16.msra.mxu0 0
        %1060 = vmatpush.bf16.msra.mxu0 0
        %1061 = vmatpush.bf16.msra.mxu0 0
        %1062 = vmatpush.bf16.msra.mxu0 0
        %1063 = vmatpush.bf16.msra.mxu0 0
        %1064 = vmatpush.bf16.msra.mxu0 %v1055
        %1065 = vmatmul.bf16.gmra.mxu0 %v1052
        %v1066 = vpop.f32.mrf.mxu0
        %v1067 = vadd.f32 %v1039, %v1066
        %v1068 = vpop.f32.mrf.mxu0
        %v1069 = vadd.f32 %v1044, %v1068
        %1070 = vdwg.mxu0
        %v1071 = vmax.f32 %v1067, 0.0
        %v1072 = vmax.f32 %v1069, 0.0
        %v1073 = vpack.c.bf16 %v1012, %v1011
        %v1074 = vpack.c.bf16 %v1031, %v1030
        %v1075 = vpack.c.bf16 %v1072, %v1071
        %v1076 = vld [vmem:[%s8] sm:$0xf]
        %v1077 = vld [vmem:[%s8 + $0x4] sm:$0xf]
        %v1078 = vld [vmem:[%s9] sm:$0xf]
        %v1079 = vld [vmem:[%s9 + $0x4] sm:$0xf]
        %v1082 = vunpack.c.l.b16 %v1078
        %v1083 = vunpack.c.l.b16 %v1079
        %v1084 = vpack.c.b16 %v1083, %v1082
        %vm1085 = vcmask 130048
        %v1087 = vsel %vm1085, %v1084, 0
        %1089 = vmatpush.bf16.msra.mxu0 0
        %1090 = vmatpush.bf16.msra.mxu0 0
        %1091 = vmatpush.bf16.msra.mxu0 0
        %1092 = vmatpush.bf16.msra.mxu0 0
        %1093 = vmatpush.bf16.msra.mxu0 0
        %1094 = vmatpush.bf16.msra.mxu0 0
        %1095 = vmatpush.bf16.msra.mxu0 0
        %1096 = vmatpush.bf16.msra.mxu0 %v1075
        %1097 = vmatmul.bf16.gmra.mxu0 %v1087
        %v1098 = vpop.f32.mrf.mxu0
        %v1099 = vadd.f32 0.0, %v1098
        %v1100 = vpop.f32.mrf.mxu0
        %v1101 = vadd.f32 0.0, %v1100
        %1102 = vdwg.mxu0
        %v1105 = vunpack.c.l.b16 %v1076
        %v1106 = vunpack.c.l.b16 %v1077
        %v1107 = vpack.c.b16 %v1106, %v1105
        %v1109 = vsel %vm1085, %v1107, 0
        %1111 = vmatpush.bf16.msra.mxu0 0
        %1112 = vmatpush.bf16.msra.mxu0 0
        %1113 = vmatpush.bf16.msra.mxu0 0
        %1114 = vmatpush.bf16.msra.mxu0 0
        %1115 = vmatpush.bf16.msra.mxu0 0
        %1116 = vmatpush.bf16.msra.mxu0 0
        %1117 = vmatpush.bf16.msra.mxu0 0
        %1118 = vmatpush.bf16.msra.mxu0 %v1073
        %1119 = vmatmul.bf16.gmra.mxu0 %v1109
        %v1120 = vpop.f32.mrf.mxu0
        %v1121 = vadd.f32 %v1099, %v1120
        %v1122 = vpop.f32.mrf.mxu0
        %v1123 = vadd.f32 %v1101, %v1122
        %1124 = vdwg.mxu0
        %v1125 = vld [vmem:[%s10] sm:$0xff]
        %v1126 = vld [vmem:[%s10 + $0x8] sm:$0xff]
        %1128 = vset.pattern.permute.xlu0 0
        %1129 = vperm.xlu0 %1128, %v1125
        %v1130 = vpop.permute.xlu0 %1129
        %1133 = vset.pattern.permute.xlu0 0
        %1134 = vperm.xlu0 %1133, %v1126
        %v1135 = vpop.permute.xlu0 %1134
        %v1137 = vadd.f32 %v1121, %v1130
        %v1138 = vadd.f32 %v1123, %v1135
        %v1139 = vld [vmem:[%s11] sm:$0xf]
        %v1140 = vld [vmem:[%s11 + $0x4] sm:$0xf]
        %v1141 = vld [vmem:[%s12] sm:$0xf]
        %v1142 = vld [vmem:[%s12 + $0x4] sm:$0xf]
        %v1145 = vunpack.c.l.b16 %v1141
        %v1146 = vunpack.c.l.b16 %v1142
        %v1147 = vpack.c.b16 %v1146, %v1145
        %v1149 = vsel %vm1085, %v1147, 0
        %1151 = vmatpush.bf16.msra.mxu0 0
        %1152 = vmatpush.bf16.msra.mxu0 0
        %1153 = vmatpush.bf16.msra.mxu0 0
        %1154 = vmatpush.bf16.msra.mxu0 0
        %1155 = vmatpush.bf16.msra.mxu0 0
        %1156 = vmatpush.bf16.msra.mxu0 0
        %1157 = vmatpush.bf16.msra.mxu0 0
        %1158 = vmatpush.bf16.msra.mxu0 %v1075
        %1159 = vmatmul.bf16.gmra.mxu0 %v1149
        %v1160 = vpop.f32.mrf.mxu0
        %v1161 = vadd.f32 0.0, %v1160
        %v1162 = vpop.f32.mrf.mxu0
        %v1163 = vadd.f32 0.0, %v1162
        %1164 = vdwg.mxu0
        %v1167 = vunpack.c.l.b16 %v1139
        %v1168 = vunpack.c.l.b16 %v1140
        %v1169 = vpack.c.b16 %v1168, %v1167
        %v1171 = vsel %vm1085, %v1169, 0
        %1173 = vmatpush.bf16.msra.mxu0 0
        %1174 = vmatpush.bf16.msra.mxu0 0
        %1175 = vmatpush.bf16.msra.mxu0 0
        %1176 = vmatpush.bf16.msra.mxu0 0
        %1177 = vmatpush.bf16.msra.mxu0 0
        %1178 = vmatpush.bf16.msra.mxu0 0
        %1179 = vmatpush.bf16.msra.mxu0 0
        %1180 = vmatpush.bf16.msra.mxu0 %v1073
        %1181 = vmatmul.bf16.gmra.mxu0 %v1171
        %v1182 = vpop.f32.mrf.mxu0
        %v1183 = vadd.f32 %v1161, %v1182
        %v1184 = vpop.f32.mrf.mxu0
        %v1185 = vadd.f32 %v1163, %v1184
        %1186 = vdwg.mxu0
        %v1187 = vld [vmem:[%s13] sm:$0xff]
        %v1188 = vld [vmem:[%s13 + $0x8] sm:$0xff]
        %1190 = vset.pattern.permute.xlu0 0
        %1191 = vperm.xlu0 %1190, %v1187
        %v1192 = vpop.permute.xlu0 %1191
        %1195 = vset.pattern.permute.xlu0 0
        %1196 = vperm.xlu0 %1195, %v1188
        %v1197 = vpop.permute.xlu0 %1196
        %v1199 = vadd.f32 %v1183, %v1192
        %v1200 = vadd.f32 %v1185, %v1197
        %v1201 = vmul.f32 %v1199, 0.5
        %v1202 = vmul.f32 %v1200, 0.5
        %v1203 = vmul.f32 %v1201, 1.442695
        %v1204 = vpow.pop %v1203
        %v1205 = vmul.f32 %v1202, 1.442695
        %v1206 = vpow.pop %v1205
        %v1207 = vld [vmem:[%s803] sm:$0xf]
        %v1208 = vld [vmem:[%s803 + $0x4] sm:$0xf]
        %v1209 = vunpack.c.l.bf16 %v1207
        %v1210 = vunpack.c.l.bf16 %v1208
        %v1211 = vmul.f32 %v1204, %v1209
        %v1212 = vmul.f32 %v1206, %v1210
        %v1213 = vadd.f32 %v1137, %v1211
        %v1214 = vadd.f32 %v1138, %v1212
        %v1215 = vld [vmem:[%s14] sm:$0xf]
        %v1216 = vld [vmem:[%s14 + $0x4] sm:$0xf]
        %v1217 = vld [vmem:[%s14 + $0x8] sm:$0xf]
        %v1218 = vld [vmem:[%s14 + $0xc] sm:$0xf]
        %v1219 = vld [vmem:[%s15] sm:$0xf]
        %v1220 = vld [vmem:[%s15 + $0x4] sm:$0xf]
        %v1221 = vld [vmem:[%s15 + $0x8] sm:$0xf]
        %v1222 = vld [vmem:[%s15 + $0xc] sm:$0xf]
        %v1227 = vunpack.c.l.b16 %v1219
        %v1228 = vunpack.c.l.b16 %v1220
        %v1229 = vunpack.c.l.b16 %v1221
        %v1230 = vunpack.c.l.b16 %v1222
        %v1231 = vpack.c.b16 %v1228, %v1227
        %v1232 = vpack.c.b16 %v1230, %v1229
        %v1234 = vsel %vm1085, %v1231, 0
        %v1237 = vsel %vm1085, %v1232, 0
        %1239 = vmatpush.bf16.msra.mxu0 0
        %1240 = vmatpush.bf16.msra.mxu0 0
        %1241 = vmatpush.bf16.msra.mxu0 0
        %1242 = vmatpush.bf16.msra.mxu0 0
        %1243 = vmatpush.bf16.msra.mxu0 0
        %1244 = vmatpush.bf16.msra.mxu0 0
        %1245 = vmatpush.bf16.msra.mxu0 0
        %1246 = vmatpush.bf16.msra.mxu0 %v1075
        %1247 = vmatmul.bf16.gmra.mxu0 %v1234
        %v1248 = vpop.f32.mrf.mxu0
        %v1249 = vadd.f32 0.0, %v1248
        %v1250 = vpop.f32.mrf.mxu0
        %v1251 = vadd.f32 0.0, %v1250
        %1252 = vmatmul.bf16.gmra.mxu0 %v1237
        %v1253 = vpop.f32.mrf.mxu0
        %v1254 = vadd.f32 0.0, %v1253
        %v1255 = vpop.f32.mrf.mxu0
        %v1256 = vadd.f32 0.0, %v1255
        %1257 = vdwg.mxu0
        %v1262 = vunpack.c.l.b16 %v1215
        %v1263 = vunpack.c.l.b16 %v1216
        %v1264 = vunpack.c.l.b16 %v1217
        %v1265 = vunpack.c.l.b16 %v1218
        %v1266 = vpack.c.b16 %v1263, %v1262
        %v1267 = vpack.c.b16 %v1265, %v1264
        %v1269 = vsel %vm1085, %v1266, 0
        %v1272 = vsel %vm1085, %v1267, 0
        %1274 = vmatpush.bf16.msra.mxu0 0
        %1275 = vmatpush.bf16.msra.mxu0 0
        %1276 = vmatpush.bf16.msra.mxu0 0
        %1277 = vmatpush.bf16.msra.mxu0 0
        %1278 = vmatpush.bf16.msra.mxu0 0
        %1279 = vmatpush.bf16.msra.mxu0 0
        %1280 = vmatpush.bf16.msra.mxu0 0
        %1281 = vmatpush.bf16.msra.mxu0 %v1074
        %1282 = vmatmul.bf16.gmra.mxu0 %v1269
        %v1283 = vpop.f32.mrf.mxu0
        %v1284 = vadd.f32 %v1249, %v1283
        %v1285 = vpop.f32.mrf.mxu0
        %v1286 = vadd.f32 %v1251, %v1285
        %1287 = vmatmul.bf16.gmra.mxu0 %v1272
        %v1288 = vpop.f32.mrf.mxu0
        %v1289 = vadd.f32 %v1254, %v1288
        %v1290 = vpop.f32.mrf.mxu0
        %v1291 = vadd.f32 %v1256, %v1290
        %1292 = vdwg.mxu0
        %v1293 = vld [vmem:[%s16] sm:$0xf]
        %v1294 = vld [vmem:[%s16 + $0x4] sm:$0xf]
        %v1295 = vld [vmem:[%s16 + $0x8] sm:$0xf]
        %v1296 = vld [vmem:[%s16 + $0xc] sm:$0xf]
        %v1297 = vpack.c.bf16 %v1214, %v1213
        %v1302 = vunpack.c.l.b16 %v1293
        %v1303 = vunpack.c.l.b16 %v1294
        %v1304 = vunpack.c.l.b16 %v1295
        %v1305 = vunpack.c.l.b16 %v1296
        %v1306 = vpack.c.b16 %v1303, %v1302
        %v1307 = vpack.c.b16 %v1305, %v1304
        %v1309 = vsel %vm1085, %v1306, 0
        %v1312 = vsel %vm1085, %v1307, 0
        %1314 = vmatpush.bf16.msra.mxu0 0
        %1315 = vmatpush.bf16.msra.mxu0 0
        %1316 = vmatpush.bf16.msra.mxu0 0
        %1317 = vmatpush.bf16.msra.mxu0 0
        %1318 = vmatpush.bf16.msra.mxu0 0
        %1319 = vmatpush.bf16.msra.mxu0 0
        %1320 = vmatpush.bf16.msra.mxu0 0
        %1321 = vmatpush.bf16.msra.mxu0 %v1297
        %1322 = vmatmul.bf16.gmra.mxu0 %v1309
        %v1323 = vpop.f32.mrf.mxu0
        %v1324 = vadd.f32 0.0, %v1323
        %v1325 = vpop.f32.mrf.mxu0
        %v1326 = vadd.f32 0.0, %v1325
        %1327 = vmatmul.bf16.gmra.mxu0 %v1312
        %v1328 = vpop.f32.mrf.mxu0
        %v1329 = vadd.f32 0.0, %v1328
        %v1330 = vpop.f32.mrf.mxu0
        %v1331 = vadd.f32 0.0, %v1330
        %1332 = vdwg.mxu0
        %v1333 = vadd.f32 %v1284, %v1324
        %v1334 = vadd.f32 %v1286, %v1326
        %v1335 = vadd.f32 %v1289, %v1329
        %v1336 = vadd.f32 %v1291, %v1331
        %v1337 = vld [vmem:[%s17] sm:$0xff]
        %v1338 = vld [vmem:[%s17 + $0x8] sm:$0xff]
        %v1339 = vld [vmem:[%s17 + $0x10] sm:$0xff]
        %v1340 = vld [vmem:[%s17 + $0x18] sm:$0xff]
        %1342 = vset.pattern.permute.xlu0 0
        %1343 = vperm.xlu0 %1342, %v1337
        %v1344 = vpop.permute.xlu0 %1343
        %1347 = vset.pattern.permute.xlu0 0
        %1348 = vperm.xlu0 %1347, %v1338
        %v1349 = vpop.permute.xlu0 %1348
        %1352 = vset.pattern.permute.xlu0 0
        %1353 = vperm.xlu0 %1352, %v1339
        %v1354 = vpop.permute.xlu0 %1353
        %1357 = vset.pattern.permute.xlu0 0
        %1358 = vperm.xlu0 %1357, %v1340
        %v1359 = vpop.permute.xlu0 %1358
        %v1361 = vadd.f32 %v1333, %v1344
        %v1362 = vadd.f32 %v1334, %v1349
        %v1363 = vadd.f32 %v1335, %v1354
        %v1364 = vadd.f32 %v1336, %v1359
        %v1365 = vmax.f32 %v1361, 0.0
        %v1366 = vmax.f32 %v1362, 0.0
        %v1367 = vmax.f32 %v1363, 0.0
        %v1368 = vmax.f32 %v1364, 0.0
        %v1369 = vld [vmem:[%s18] sm:$0x3]
        %v1370 = vpack.c.bf16 %v1366, %v1365
        %v1371 = vpack.c.bf16 %v1368, %v1367
        %v1372 = vld [vmem:[%s19] sm:$0x7]
        %1374 = vset.pattern.permute.xlu0 0
        %1375 = vperm.xlu0 %1374, %v1372
        %v1376 = vpop.permute.xlu0 %1375
        %vm1378 = vcmask 261120
        %v1380 = vsel %vm1378, %v1369, 0
        %1382 = vmatpush.bf16.msra.mxu0 0
        %1383 = vmatpush.bf16.msra.mxu0 0
        %1384 = vmatpush.bf16.msra.mxu0 0
        %1385 = vmatpush.bf16.msra.mxu0 0
        %1386 = vmatpush.bf16.msra.mxu0 0
        %1387 = vmatpush.bf16.msra.mxu0 0
        %1388 = vmatpush.bf16.msra.mxu0 %v1371
        %1389 = vmatpush.bf16.msra.mxu0 %v1370
        %1390 = vmatmul.bf16.gmra.mxu0 %v1380
        %v1391 = vpop.f32.mrf.mxu0
        %v1392 = vadd.f32 %v1376, %v1391
        %v1393 = vpop.f32.mrf.mxu0
        %1394 = vdwg.mxu0
        %v1395 = vsub.f32 0.0, %v1392
        %v1396 = vmul.f32 %v1395, 1.442695
        %v1397 = vpow.pop %v1396
        %v1398 = vadd.f32 %v1397, 1.0
        %v1399 = vrcp.pop %v1398
        %v1400 = vmul.f32 %v1398, %v1399
        %v1401 = vsub.f32 1.0, %v1400
        %v1402 = vmul.f32 %v1399, %v1401
        %v1403 = vadd.f32 %v1399, %v1402
        %vm1404 = vweird.f32 %v1398
        %vm1405 = vweird.f32 %v1399
        %vm1406 = vmor %vm1404, %vm1405
        %v1407 = vsel %vm1406, %v1399, %v1403
        %v1408 = vand.u32 2147483647, %v1398
        %vm1409 = vcmp.eq.f32.partialorder %v1408, 8.507059e+37
        %v1410 = vand.u32 %v1398, 2147483648
        %v1411 = vor.u32 1.1754944e-38, %v1410
        %v1412 = vsel %vm1409, %v1411, %v1407
        %v1413 = vmul.f32 1.0, %v1412
        %1414 = vst [vmem:[%s948] sm:$0x7] %v1413
        %1415 = vst [vmem:[%s891] sm:$0xff] %v1137
        %1416 = vst [vmem:[%s891 + $0x8] sm:$0xff] %v1138
        %1417 = vst [vmem:[%s898] sm:$0xff] %v1199
        %1418 = vst [vmem:[%s898 + $0x8] sm:$0xff] %v1200
        %v1419 = vunpack.c.l.bf16 %v964
        %v1420 = vsub.f32 %v1419, %v1413
        %v1421 = vmul.f32 %v1420, %v1420
        %vm1422 = vcmask 1042432
        %v1423 = vsel %vm1422, %v1421, 0.0
        %1424 = vadd.xlane.f32.xlu0 %v1423
        %v1425 = vpop.xlane.xlu0 %1424
        %v1426 = vrot.slane %v1425, 4
        %v1427 = vadd.f32 %v1425, %v1426
        %v1428 = vrot.slane %v1427, 2
        %v1429 = vadd.f32 %v1427, %v1428
        %v1430 = vrot.slane %v1429, 1
        %v1431 = vadd.f32 %v1429, %v1430
        %s1432 = vtos %v1431
        %v1433 = vadd.f32 %v1199, 1.0
        %v1434 = vadd.f32 %v1200, 1.0
        %v1435 = vmul.f32 %v1137, %v1137
        %v1436 = vmul.f32 %v1138, %v1138
        %v1437 = vsub.f32 %v1433, %v1435
        %v1438 = vsub.f32 %v1434, %v1436
        %v1439 = vmul.f32 %v1199, 1.442695
        %v1440 = vpow.pop %v1439
        %v1441 = vmul.f32 %v1200, 1.442695
        %v1442 = vpow.pop %v1441
        %v1443 = vsub.f32 %v1437, %v1440
        %v1444 = vsub.f32 %v1438, %v1442
        %v1445 = vadd.f32 %v1443, %v1444
        %1446 = vadd.xlane.f32.xlu0 %v1445
        %v1447 = vpop.xlane.xlu0 %1446
        %v1448 = vrot.slane %v1447, 4
        %v1449 = vadd.f32 %v1447, %v1448
        %v1450 = vrot.slane %v1449, 2
        %v1451 = vadd.f32 %v1449, %v1450
        %v1452 = vrot.slane %v1451, 1
        %v1453 = vadd.f32 %v1451, %v1452
        %s1454 = vtos %v1453
        %s1455 = smul.f32 %s1454, -0.5
        %v1456 = vstv %s1432
        %vm1457 = vcmask 0
        %1458 = vst.msk [vmem:[%s955] sm:$0x1] %vm1457, %v1456
        %v1459 = vstv %s1455
        %1460 = vst.msk [vmem:[%s962] sm:$0x1] %vm1457, %v1459
        %p1461 = scmp.lt.s32.totalorder %s46, 1
        %s1462 = scalar_select %p1461, %s46, 1
        %p1463 = scmp.lt.s32.totalorder %s47, 1
        %s1464 = scalar_select %p1463, %s47, 1
        %s1465 = smul.addr %s1462, 2
        %s1466 = sadd.s32 %s1464, %s1465
        %s1467 = smul.addr %s1466, 4
        %s1468 = scalar_lea.vmem %s20, %s1467
        %s1469 = sand.u32 %s540, 1
        %s1470 = scalar_lea.sflag [#allocation4], %s1469
        %s1471 = sand.u32 %s540, 1
        %s1472 = smul.addr %s1471, 16
        %s1473 = scalar_lea.vmem [#allocation3], %s1472
        %s1474 = sand.u32 %s568, 1
        %s1475 = scalar_lea.sflag [#allocation6], %s1474
        %s1476 = sand.u32 %s568, 1
        %s1477 = smul.addr %s1476, 16
        %s1478 = scalar_lea.vmem [#allocation5], %s1477
        %p1479 = scmp.lt.s32.totalorder %s46, 1
        %s1480 = scalar_select %p1479, %s46, 1
        %p1481 = scmp.lt.s32.totalorder %s47, 1
        %s1482 = scalar_select %p1481, %s47, 1
        %s1483 = smul.addr %s1480, 2
        %s1484 = sadd.s32 %s1482, %s1483
        %s1485 = scalar_lea.vmem %s23, %s1484
        %p1486 = scmp.lt.s32.totalorder %s46, 1
        %s1487 = scalar_select %p1486, %s46, 1
        %p1488 = scmp.lt.s32.totalorder %s47, 1
        %s1489 = scalar_select %p1488, %s47, 1
        %s1490 = smul.addr %s1487, 2
        %s1491 = sadd.s32 %s1489, %s1490
        %s1492 = scalar_lea.vmem %s24, %s1491
        // Predicated region
        $region142: #{vae_forward_step.1} parent=136 // pred_check
          %p1493 = pneg %p522
        $region143: #{vae_forward_step.1} parent=136 // pred_check_branch
          %1495 = sbr.rel (%p1493) target = $region145
        $region144: #{vae_forward_step.1} parent=136 // pred_region
          _
        $region145: #{vae_forward_step.1} parent=136 // pred_fallthru
          _
        // Predicated region
        $region146: #{vae_forward_step.1} parent=136 // pred_check
          %p1496 = pneg %p550
        $region147: #{vae_forward_step.1} parent=136 // pred_check_branch
          %1498 = sbr.rel (%p1496) target = $region149
        $region148: #{vae_forward_step.1} parent=136 // pred_region
          %1500 = vsyncadd %s1470, 0
          %s1501 = smul.addr %s46, 4
          %s1502 = sadd.s32 %s47, %s1501
          %s1503 = smul.addr %s1502, 8
          %s1504 = scalar_lea.hbm %s21, %s1503
          %s1505 = sshll.u32 %s1473, 4
          %s1506 = int_to_ptr.vmem [resolvable:$true] %s1505
          %s1507 = sshll.u32 %s1504, 4
          %s1508 = int_to_ptr.hbm [resolvable:$true] %s1507
          %1513 = dma.vmem_to_hbm [thread:$0]  %s1506, 256, %s1508, %s1470, 128, 256, 8
        $region149: #{vae_forward_step.1} parent=136 // pred_fallthru
          _
        // Predicated region
        $region150: #{vae_forward_step.1} parent=136 // pred_check
          %p1514 = pneg %p578
        $region151: #{vae_forward_step.1} parent=136 // pred_check_branch
          %1516 = sbr.rel (%p1514) target = $region153
        $region152: #{vae_forward_step.1} parent=136 // pred_region
          %1518 = vsyncadd %s1475, 0
          %s1519 = smul.addr %s46, 4
          %s1520 = sadd.s32 %s47, %s1519
          %s1521 = smul.addr %s1520, 8
          %s1522 = scalar_lea.hbm %s22, %s1521
          %s1523 = sshll.u32 %s1478, 4
          %s1524 = int_to_ptr.vmem [resolvable:$true] %s1523
          %s1525 = sshll.u32 %s1522, 4
          %s1526 = int_to_ptr.hbm [resolvable:$true] %s1525
          %1531 = dma.vmem_to_hbm [thread:$0]  %s1524, 256, %s1526, %s1475, 128, 256, 8
        $region153: #{vae_forward_step.1} parent=136 // pred_fallthru
          _
        // Predicated region
        $region154: #{vae_forward_step.1} parent=136 // pred_check
          %p1532 = pneg %p606
        $region155: #{vae_forward_step.1} parent=136 // pred_check_branch
          %1534 = sbr.rel (%p1532) target = $region157
        $region156: #{vae_forward_step.1} parent=136 // pred_region
          _
        $region157: #{vae_forward_step.1} parent=136 // pred_fallthru
          _
        // Predicated region
        $region158: #{vae_forward_step.1} parent=136 // pred_check
          %p1535 = pneg %p634
        $region159: #{vae_forward_step.1} parent=136 // pred_check_branch
          %1537 = sbr.rel (%p1535) target = $region161
        $region160: #{vae_forward_step.1} parent=136 // pred_region
          _
        $region161: #{vae_forward_step.1} parent=136 // pred_fallthru
          _
      $region137: #{vae_forward_step.1} parent=5 // pred_fallthru
        _
      %p1538 = scmp.le.s32.totalorder 2, %s37
      // Predicated region
      $region162: #{vae_forward_step.1} parent=5 // pred_check
        %p1539 = pneg %p1538
      $region163: #{vae_forward_step.1} parent=5 // pred_check_branch
        %1541 = sbr.rel (%p1539) target = $region165
      $region164: #{vae_forward_step.1} parent=5 // pred_region
        %s1542 = ssub.s32 %s37, 2
        // Predicated region
        $region166: #{vae_forward_step.1} parent=164 // pred_check
          %p1543 = pneg %p528
        $region167: #{vae_forward_step.1} parent=164 // pred_check_branch
          %1545 = sbr.rel (%p1543) target = $region169
        $region168: #{vae_forward_step.1} parent=164 // pred_region
          %p1546 = scmp.lt.s32.totalorder %s48, 1
          %s1547 = scalar_select %p1546, %s48, 1
          %p1548 = scmp.lt.s32.totalorder %s49, 1
          %s1549 = scalar_select %p1548, %s49, 1
          %s1550 = smul.addr %s1547, 2
          %s1551 = sadd.s32 %s1549, %s1550
          %s1552 = smul.addr %s1551, 4
          %s1553 = scalar_lea.vmem %s20, %s1552
        $region169: #{vae_forward_step.1} parent=164 // pred_fallthru
          _
        // Predicated region
        $region170: #{vae_forward_step.1} parent=164 // pred_check
          %p1554 = pneg %p556
        $region171: #{vae_forward_step.1} parent=164 // pred_check_branch
          %1556 = sbr.rel (%p1554) target = $region173
        $region172: #{vae_forward_step.1} parent=164 // pred_region
          %s1557 = sand.u32 %s541, 1
          %s1558 = scalar_lea.sflag [#allocation4], %s1557
          %s1559 = sand.u32 %s541, 1
          %s1560 = smul.addr %s1559, 16
          %s1561 = scalar_lea.vmem [#allocation3], %s1560
          %1563 = dma.done %s1558, 256
        $region173: #{vae_forward_step.1} parent=164 // pred_fallthru
          _
        // Predicated region
        $region174: #{vae_forward_step.1} parent=164 // pred_check
          %p1564 = pneg %p584
        $region175: #{vae_forward_step.1} parent=164 // pred_check_branch
          %1566 = sbr.rel (%p1564) target = $region177
        $region176: #{vae_forward_step.1} parent=164 // pred_region
          %s1567 = sand.u32 %s569, 1
          %s1568 = scalar_lea.sflag [#allocation6], %s1567
          %s1569 = sand.u32 %s569, 1
          %s1570 = smul.addr %s1569, 16
          %s1571 = scalar_lea.vmem [#allocation5], %s1570
          %1573 = dma.done %s1568, 256
        $region177: #{vae_forward_step.1} parent=164 // pred_fallthru
          _
        // Predicated region
        $region178: #{vae_forward_step.1} parent=164 // pred_check
          %p1574 = pneg %p612
        $region179: #{vae_forward_step.1} parent=164 // pred_check_branch
          %1576 = sbr.rel (%p1574) target = $region181
        $region180: #{vae_forward_step.1} parent=164 // pred_region
          %p1577 = scmp.lt.s32.totalorder %s48, 1
          %s1578 = scalar_select %p1577, %s48, 1
          %p1579 = scmp.lt.s32.totalorder %s49, 1
          %s1580 = scalar_select %p1579, %s49, 1
          %s1581 = smul.addr %s1578, 2
          %s1582 = sadd.s32 %s1580, %s1581
          %s1583 = scalar_lea.vmem %s23, %s1582
        $region181: #{vae_forward_step.1} parent=164 // pred_fallthru
          _
        // Predicated region
        $region182: #{vae_forward_step.1} parent=164 // pred_check
          %p1584 = pneg %p640
        $region183: #{vae_forward_step.1} parent=164 // pred_check_branch
          %1586 = sbr.rel (%p1584) target = $region185
        $region184: #{vae_forward_step.1} parent=164 // pred_region
          %p1587 = scmp.lt.s32.totalorder %s48, 1
          %s1588 = scalar_select %p1587, %s48, 1
          %p1589 = scmp.lt.s32.totalorder %s49, 1
          %s1590 = scalar_select %p1589, %s49, 1
          %s1591 = smul.addr %s1588, 2
          %s1592 = sadd.s32 %s1590, %s1591
          %s1593 = scalar_lea.vmem %s24, %s1592
        $region185: #{vae_forward_step.1} parent=164 // pred_fallthru
          _
      $region165: #{vae_forward_step.1} parent=5 // pred_fallthru
        _
    $region6: #{vae_forward_step.1} parent=1 // loop_footer
      %s41 = sadd.s32 1, %s37
    $region7: #{vae_forward_step.1} parent=1 // loop_footer_branch
      %36 = sbr.rel target = $region3
    $region8: #{vae_forward_step.1} parent=1 // loop_exit
      _
    %1594 = vsyncpa [#allocation4], 1
    %s1595 = scalar_lea.sflag [#allocation4], 1
    %1596 = vsyncpa %s1595, 1
    %1597 = vsyncpa [#allocation6], 1
    %s1598 = scalar_lea.sflag [#allocation6], 1
    %1599 = vsyncpa %s1598, 1

</llo_original>
